<compile_context>
chip_gen: v5e
topology: v5e:2x2
jax: 0.10.0
libtpu: 0.0.40
codegen_flags: <defaults>
</compile_context>

<pallas_src>
import numpy as np
import jax
import jax.numpy as jnp
from jax.experimental import pallas as pl
from jax.experimental.pallas import tpu as pltpu

INP_CHANNELS = 4
OUT_DIM = 32
C1 = 5            # conv1 out channels
C2 = 5            # conv2 out channels
KH = KW = 3
H_IN = W_IN = 10
H1 = W1 = 8       # conv output spatial size
GRID = H_IN * W_IN            # 100: padded spatial grid (lane axis per channel)

K_IN = 512        # padded Cin*GRID  (400 -> 512)
K_HID = 512       # padded C*GRID    (500 -> 512)
K_OUT = 128       # padded OUT_DIM   (32  -> 128)
TB_MAX = 512      # batch tile (fits VMEM comfortably on v5e/v6e/v7x)


def fused_kernel(x_ref, m1_ref, b1_ref, m2_ref, b2_ref, wl_ref, bl_ref, out_ref):
    """
    x_ref  : (TB, 512)    padded flattened input  (c*100 + iy*10 + ix, zero-padded)
    m1_ref : (512, 512)   folded conv1 matrix (all taps + weights)
    b1_ref : (1, 512)     conv1 bias broadcast over grid positions
    m2_ref : (512, 512)   folded conv2 matrix (zero rows on border -> implicit pad=1)
    b2_ref : (1, 512)     conv2 bias broadcast over grid positions
    wl_ref : (512, 128)   linear weight with NCHW-flatten permutation folded in
    bl_ref : (1, 128)     linear bias (padded)
    out_ref: (TB, 128)    padded output
    """
    a1 = jnp.maximum(
        jnp.dot(x_ref[...], m1_ref[...], preferred_element_type=jnp.float32)
        + b1_ref[...], 0.0)
    a2 = jnp.maximum(
        jnp.dot(a1, m2_ref[...], preferred_element_type=jnp.float32)
        + b2_ref[...], 0.0)
    out_ref[...] = (
        jnp.dot(a2, wl_ref[...], preferred_element_type=jnp.float32)
        + bl_ref[...]).astype(out_ref.dtype)


def prepare_params(params):
    """One-time host-side fold of the PyTorch-style parameters into layer matrices."""
    w1, b1, w2, b2, wl, bl = (np.asarray(p, np.float32) for p in params)

    ii, jj = np.meshgrid(np.arange(H1), np.arange(W1), indexing="ij")
    t_idx = (ii + 1) * W_IN + (jj + 1)          # interior grid position of output (i,j)

    # ---- conv1 (valid): all 10x10 source positions are real data ----
    M1 = np.zeros((K_IN, K_HID), np.float32)
    for di in range(KH):
        for dj in range(KW):
            u_idx = (ii + di) * W_IN + (jj + dj)
            for o in range(C1):
                for c in range(INP_CHANNELS):
                    M1[c * GRID + u_idx, o * GRID + t_idx] = w1[o, c, di, dj]

    # ---- conv2 (padding=1): border source positions act as zero padding ->
    #      simply leave those rows zero (replaces the old `* interior` mask) ----
    M2 = np.zeros((K_HID, K_HID), np.float32)
    for di in range(KH):
        for dj in range(KW):
            r = ii + di
            s = jj + dj
            valid = (r >= 1) & (r <= H1) & (s >= 1) & (s <= W1)
            u_v = (r * W_IN + s)[valid]
            t_v = t_idx[valid]
            for o in range(C2):
                for c in range(C1):
                    M2[c * GRID + u_v, o * GRID + t_v] = w2[o, c, di, dj]

    # ---- linear: NCHW flatten permutation folded in; border/pad rows stay zero ----
    WL = np.zeros((K_HID, K_OUT), np.float32)
    wl_r = wl.reshape(OUT_DIM, C2, H1, W1)
    for c in range(C2):
        for i in range(H1):
            for j in range(W1):
                WL[c * GRID + (i + 1) * W_IN + (j + 1), :OUT_DIM] = wl_r[:, c, i, j]

    b1v = np.zeros((1, K_HID), np.float32)
    b1v[0, :C1 * GRID] = np.repeat(b1, GRID)
    b2v = np.zeros((1, K_HID), np.float32)
    b2v[0, :C2 * GRID] = np.repeat(b2, GRID)
    blv = np.zeros((1, K_OUT), np.float32)
    blv[0, :OUT_DIM] = bl

    return tuple(jnp.asarray(a) for a in (M1, b1v, M2, b2v, WL, blv))


@jax.jit
def my_model_forward(x, prepared):
    m1, b1v, m2, b2v, wl, blv = prepared
    B = x.shape[0]

    # Batch tiling: pad B up to a multiple of 8 sublanes, tile at TB (<= TB_MAX).
    B8 = ((B + 7) // 8) * 8
    TB = min(B8, TB_MAX)
    BP = ((B8 + TB - 1) // TB) * TB

    x_flat = x.reshape(B, INP_CHANNELS * GRID)                    # (B, 400)
    x_pad = jnp.zeros((BP, K_IN), jnp.float32)
    x_pad = x_pad.at[:B, :INP_CHANNELS * GRID].set(x_flat)        # lane/sublane aligned

    out_pad = pl.pallas_call(
        fused_kernel,
        out_shape=jax.ShapeDtypeStruct((BP, K_OUT), jnp.float32),
        grid=(BP // TB,),
        in_specs=[
            pl.BlockSpec((TB, K_IN), lambda i: (i, 0)),
            pl.BlockSpec((K_IN, K_HID), lambda i: (0, 0)),
            pl.BlockSpec((1, K_HID), lambda i: (0, 0)),
            pl.BlockSpec((K_HID, K_HID), lambda i: (0, 0)),
            pl.BlockSpec((1, K_HID), lambda i: (0, 0)),
            pl.BlockSpec((K_HID, K_OUT), lambda i: (0, 0)),
            pl.BlockSpec((1, K_OUT), lambda i: (0, 0)),
        ],
        out_specs=pl.BlockSpec((TB, K_OUT), lambda i: (i, 0)),
        compiler_params=pltpu.CompilerParams(
            dimension_semantics=("parallel",)),   # shards batch tiles across v7x's 2 TCs
    )(x_pad, m1, b1v, m2, b2v, wl, blv)

    return out_pad[:B, :OUT_DIM]


def reference_forward(x, params):
    """Pure-JAX reference matching the PyTorch module semantics."""
    w1, b1, w2, b2, wl, bl = params
    dn = ('NCHW', 'OIHW', 'NCHW')
    y = jax.lax.conv_general_dilated(x, w1, (1, 1), 'VALID', dimension_numbers=dn)
    y = jnp.maximum(y + b1.reshape(1, -1, 1, 1), 0.0)
    y = jax.lax.conv_general_dilated(y, w2, (1, 1), ((1, 1), (1, 1)), dimension_numbers=dn)
    y = jnp.maximum(y + b2.reshape(1, -1, 1, 1), 0.0)
    flat = y.reshape(y.shape[0], -1)
    return flat @ wl.T + bl


def init_params(key):
    k1, k2, k3, k4, k5, k6 = jax.random.split(key, 6)
    w1 = jax.random.normal(k1, (C1, INP_CHANNELS, KH, KW), jnp.float32) * 0.1
    b1 = jax.random.normal(k2, (C1,), jnp.float32) * 0.1
    w2 = jax.random.normal(k3, (C2, C1, KH, KW), jnp.float32) * 0.1
    b2 = jax.random.normal(k4, (C2,), jnp.float32) * 0.1
    wl = jax.random.normal(k5, (OUT_DIM, C2 * H1 * W1), jnp.float32) * 0.05
    bl = jax.random.normal(k6, (OUT_DIM,), jnp.float32) * 0.05
    return (w1, b1, w2, b2, wl, bl)


if __name__ == "__main__":
    key = jax.random.PRNGKey(0)
    pkey, xkey = jax.random.split(key)
    params = init_params(pkey)
    prepared = prepare_params(params)   # one-time host-side fold, outside jit

    B = 2
    x = jax.random.normal(xkey, (B, INP_CHANNELS, H_IN, W_IN), jnp.float32)

    out = my_model_forward(x, prepared)
    out = jax.block_until_ready(out)

    ref = reference_forward(x, params)
    assert out.shape == (B, OUT_DIM), out.shape
    assert jnp.allclose(out, ref, rtol=1e-3, atol=1e-3), \
        f"max abs diff = {jnp.max(jnp.abs(out - ref))}"

    print("KERNEL_OK")
</pallas_src>

<mosaic_0001>
module attributes {stable_mosaic.version = 11 : i64} {
  func.func @fused_kernel(%arg0: i32, %arg1: memref<8x512xf32, #tpu.memory_space<vmem>>, %arg2: memref<512x512xf32, #tpu.memory_space<vmem>>, %arg3: memref<1x512xf32, #tpu.memory_space<vmem>>, %arg4: memref<512x512xf32, #tpu.memory_space<vmem>>, %arg5: memref<1x512xf32, #tpu.memory_space<vmem>>, %arg6: memref<512x128xf32, #tpu.memory_space<vmem>>, %arg7: memref<1x128xf32, #tpu.memory_space<vmem>>, %arg8: memref<8x128xf32, #tpu.memory_space<vmem>>) attributes {dimension_semantics = [#tpu.dimension_semantics<parallel>], iteration_bounds = array<i64: 1>, scalar_prefetch = 0 : i64, scratch_operands = 0 : i64, tpu.core_type = #tpu.core_type<tc>, window_params = [{transform_indices = @transform_0, window_bounds = array<i64: 8, 512>}, {pipeline_mode = #tpu.pipeline_mode<synchronous>, transform_indices = @transform_1, window_bounds = array<i64: 512, 512>}, {pipeline_mode = #tpu.pipeline_mode<synchronous>, transform_indices = @transform_2, window_bounds = array<i64: 1, 512>}, {pipeline_mode = #tpu.pipeline_mode<synchronous>, transform_indices = @transform_3, window_bounds = array<i64: 512, 512>}, {pipeline_mode = #tpu.pipeline_mode<synchronous>, transform_indices = @transform_4, window_bounds = array<i64: 1, 512>}, {pipeline_mode = #tpu.pipeline_mode<synchronous>, transform_indices = @transform_5, window_bounds = array<i64: 512, 128>}, {pipeline_mode = #tpu.pipeline_mode<synchronous>, transform_indices = @transform_6, window_bounds = array<i64: 1, 128>}, {transform_indices = @transform_7, window_bounds = array<i64: 8, 128>}]} {
    %c0 = arith.constant 0 : index
    %c0_0 = arith.constant 0 : index
    %0 = vector.load %arg1[%c0, %c0_0] : memref<8x512xf32, #tpu.memory_space<vmem>>, vector<8x512xf32>
    %c0_1 = arith.constant 0 : index
    %c0_2 = arith.constant 0 : index
    %1 = vector.load %arg2[%c0_1, %c0_2] : memref<512x512xf32, #tpu.memory_space<vmem>>, vector<512x512xf32>
    %cst = arith.constant dense<0.000000e+00> : vector<8x512xf32>
    %2 = tpu.matmul %0, %1, %cst {dimension_numbers = #tpu.dot_dimension_numbers<[1], [0], [0], [1], [0, 0, 1, 1], [], []>} : vector<8x512xf32>, vector<512x512xf32>, vector<8x512xf32> -> vector<8x512xf32>
    %c0_3 = arith.constant 0 : index
    %c0_4 = arith.constant 0 : index
    %3 = vector.load %arg3[%c0_3, %c0_4] : memref<1x512xf32, #tpu.memory_space<vmem>>, vector<1x512xf32>
    %4 = vector.broadcast %3 : vector<1x512xf32> to vector<8x512xf32>
    %5 = arith.addf %2, %4 : vector<8x512xf32>
    %cst_5 = arith.constant 0.000000e+00 : f32
    %6 = vector.broadcast %cst_5 : f32 to vector<8x512xf32>
    %7 = arith.maximumf %5, %6 : vector<8x512xf32>
    %c0_6 = arith.constant 0 : index
    %c0_7 = arith.constant 0 : index
    %8 = vector.load %arg4[%c0_6, %c0_7] : memref<512x512xf32, #tpu.memory_space<vmem>>, vector<512x512xf32>
    %cst_8 = arith.constant dense<0.000000e+00> : vector<8x512xf32>
    %9 = tpu.matmul %7, %8, %cst_8 {dimension_numbers = #tpu.dot_dimension_numbers<[1], [0], [0], [1], [0, 0, 1, 1], [], []>} : vector<8x512xf32>, vector<512x512xf32>, vector<8x512xf32> -> vector<8x512xf32>
    %c0_9 = arith.constant 0 : index
    %c0_10 = arith.constant 0 : index
    %10 = vector.load %arg5[%c0_9, %c0_10] : memref<1x512xf32, #tpu.memory_space<vmem>>, vector<1x512xf32>
    %11 = vector.broadcast %10 : vector<1x512xf32> to vector<8x512xf32>
    %12 = arith.addf %9, %11 : vector<8x512xf32>
    %cst_11 = arith.constant 0.000000e+00 : f32
    %13 = vector.broadcast %cst_11 : f32 to vector<8x512xf32>
    %14 = arith.maximumf %12, %13 : vector<8x512xf32>
    %c0_12 = arith.constant 0 : index
    %c0_13 = arith.constant 0 : index
    %15 = vector.load %arg6[%c0_12, %c0_13] : memref<512x128xf32, #tpu.memory_space<vmem>>, vector<512x128xf32>
    %cst_14 = arith.constant dense<0.000000e+00> : vector<8x128xf32>
    %16 = tpu.matmul %14, %15, %cst_14 {dimension_numbers = #tpu.dot_dimension_numbers<[1], [0], [0], [1], [0, 0, 1, 1], [], []>} : vector<8x512xf32>, vector<512x128xf32>, vector<8x128xf32> -> vector<8x128xf32>
    %c0_15 = arith.constant 0 : index
    %c0_16 = arith.constant 0 : index
    %17 = vector.load %arg7[%c0_15, %c0_16] : memref<1x128xf32, #tpu.memory_space<vmem>>, vector<1x128xf32>
    %18 = vector.broadcast %17 : vector<1x128xf32> to vector<8x128xf32>
    %19 = arith.addf %16, %18 : vector<8x128xf32>
    %c0_17 = arith.constant 0 : index
    %c0_18 = arith.constant 0 : index
    %20 = vector.load %arg8[%c0_17, %c0_18] : memref<8x128xf32, #tpu.memory_space<vmem>>, vector<8x128xf32>
    tpu.vector_store %arg8[%c0_17, %c0_18], %19 {strides = array<i32>} : memref<8x128xf32, #tpu.memory_space<vmem>>, vector<8x128xf32>,
    return
  }
  func.func @transform_0(%arg0: i32) -> (i32, i32) {
    %c0_i32 = arith.constant 0 : i32
    %c0_i32_0 = arith.constant 0 : i32
    return %arg0, %c0_i32 : i32, i32
  }
  func.func @transform_1(%arg0: i32) -> (i32, i32) {
    %c0_i32 = arith.constant 0 : i32
    %c0_i32_0 = arith.constant 0 : i32
    %c0_i32_1 = arith.constant 0 : i32
    return %c0_i32, %c0_i32_0 : i32, i32
  }
  func.func @transform_2(%arg0: i32) -> (i32, i32) {
    %c0_i32 = arith.constant 0 : i32
    %c0_i32_0 = arith.constant 0 : i32
    %c0_i32_1 = arith.constant 0 : i32
    return %c0_i32, %c0_i32_0 : i32, i32
  }
  func.func @transform_3(%arg0: i32) -> (i32, i32) {
    %c0_i32 = arith.constant 0 : i32
    %c0_i32_0 = arith.constant 0 : i32
    %c0_i32_1 = arith.constant 0 : i32
    return %c0_i32, %c0_i32_0 : i32, i32
  }
  func.func @transform_4(%arg0: i32) -> (i32, i32) {
    %c0_i32 = arith.constant 0 : i32
    %c0_i32_0 = arith.constant 0 : i32
    %c0_i32_1 = arith.constant 0 : i32
    return %c0_i32, %c0_i32_0 : i32, i32
  }
  func.func @transform_5(%arg0: i32) -> (i32, i32) {
    %c0_i32 = arith.constant 0 : i32
    %c0_i32_0 = arith.constant 0 : i32
    %c0_i32_1 = arith.constant 0 : i32
    return %c0_i32, %c0_i32_0 : i32, i32
  }
  func.func @transform_6(%arg0: i32) -> (i32, i32) {
    %c0_i32 = arith.constant 0 : i32
    %c0_i32_0 = arith.constant 0 : i32
    %c0_i32_1 = arith.constant 0 : i32
    return %c0_i32, %c0_i32_0 : i32, i32
  }
  func.func @transform_7(%arg0: i32) -> (i32, i32) {
    %c0_i32 = arith.constant 0 : i32
    %c0_i32_0 = arith.constant 0 : i32
    return %arg0, %c0_i32 : i32, i32
  }
}

</mosaic_0001>

<llo_original>
// kernel: my_model_forward.1
$region0: #{my_model_forward.1}
  #allocation0 [shape = 'u32[]', space=smem, size = 0x4, offset = 0x4, fixed_abs, tag = 'smem constant byte address 0x4 - core index']
  #allocation1 [shape = 'u32[72,128]{1,0:T(1,128)}', space=vmem, size = 0x9000, scoped, tag = 'internal scratch']
  %s0 = inlined_call_operand.vmem [shape: f32[8,512], index: 0, kind: input, shape index: {}]
  %s1 = inlined_call_operand.hbm [shape: f32[512,512], index: 1, kind: input, shape index: {}]
  %s2 = inlined_call_operand.vmem [shape: f32[1,512], index: 2, kind: input, shape index: {}]
  %s3 = inlined_call_operand.hbm [shape: f32[512,512], index: 3, kind: input, shape index: {}]
  %s4 = inlined_call_operand.vmem [shape: f32[1,512], index: 4, kind: input, shape index: {}]
  %s5 = inlined_call_operand.hbm [shape: f32[512,128], index: 5, kind: input, shape index: {}]
  %s6 = inlined_call_operand.vmem [shape: f32[1,128], index: 6, kind: input, shape index: {}]
  %s7 = inlined_call_operand.vmem [shape: f32[8,128], index: 7, kind: output, shape index: {}]
  %s8 = sld [smem:[#allocation0]]
  $region50: #{my_model_forward.1} parent=0
    _
  %s10 = ssub.s32 1, %s8
  %s11 = scalar_select 0, %s10, %s8
  $region1: #{my_model_forward.1} parent=0
    #allocation2 [shape = 'u8[1048576]{0}', space=vmem, size = 0x100000, scoped, tag = 'input window, operand 1, single buffered']
    #allocation3 [shape = 's32[1]{0}', space=sflag, size = 0x4, scoped, tag = 'scoped memory for my_model_forward.1']
    #allocation4 [shape = 'u8[1048576]{0}', space=vmem, size = 0x100000, scoped, tag = 'input window, operand 3, single buffered']
    #allocation5 [shape = 's32[1]{0}', space=sflag, size = 0x4, scoped, tag = 'scoped memory for my_model_forward.1']
    #allocation6 [shape = 'u8[262144]{0}', space=vmem, size = 0x40000, scoped, tag = 'input window, operand 5, single buffered']
    %12 = vsyncpa [#allocation3], 0
    %13 = vsyncpa [#allocation5], 0
    // Predicated region
    $region2: #{my_model_forward.1} parent=1 // pred_check
      _
    $region3: #{my_model_forward.1} parent=1 // pred_check_branch
      %15 = sbr.rel (0) target = $region5
    $region4: #{my_model_forward.1} parent=1 // pred_region
      _
    $region5: #{my_model_forward.1} parent=1 // pred_fallthru
      _
    // Predicated region
    $region6: #{my_model_forward.1} parent=1 // pred_check
      _
    $region7: #{my_model_forward.1} parent=1 // pred_check_branch
      %17 = sbr.rel (0) target = $region9
    $region8: #{my_model_forward.1} parent=1 // pred_region
      %19 = vsyncadd [#allocation3], 0
      %s20 = sshll.u32 %s1, 4
      %s21 = int_to_ptr.hbm [resolvable:$true] %s20
      %s22 = sshll.u32 [#allocation2], 4
      %s23 = int_to_ptr.vmem [resolvable:$true] %s22
      %28 = dma.hbm_to_vmem [thread:$0]  %s21, 32768, %s23, [#allocation3], 512, 512, 32
    $region9: #{my_model_forward.1} parent=1 // pred_fallthru
      _
    // Predicated region
    $region10: #{my_model_forward.1} parent=1 // pred_check
      _
    $region11: #{my_model_forward.1} parent=1 // pred_check_branch
      %30 = sbr.rel (0) target = $region13
    $region12: #{my_model_forward.1} parent=1 // pred_region
      _
    $region13: #{my_model_forward.1} parent=1 // pred_fallthru
      _
    // Predicated region
    $region14: #{my_model_forward.1} parent=1 // pred_check
      _
    $region15: #{my_model_forward.1} parent=1 // pred_check_branch
      %32 = sbr.rel (0) target = $region17
    $region16: #{my_model_forward.1} parent=1 // pred_region
      %34 = vsyncadd [#allocation5], 0
      %s35 = sshll.u32 %s3, 4
      %s36 = int_to_ptr.hbm [resolvable:$true] %s35
      %s37 = sshll.u32 [#allocation4], 4
      %s38 = int_to_ptr.vmem [resolvable:$true] %s37
      %43 = dma.hbm_to_vmem [thread:$0]  %s36, 32768, %s38, [#allocation5], 512, 512, 32
    $region17: #{my_model_forward.1} parent=1 // pred_fallthru
      _
    // Predicated region
    $region18: #{my_model_forward.1} parent=1 // pred_check
      _
    $region19: #{my_model_forward.1} parent=1 // pred_check_branch
      %45 = sbr.rel (0) target = $region21
    $region20: #{my_model_forward.1} parent=1 // pred_region
      _
    $region21: #{my_model_forward.1} parent=1 // pred_fallthru
      _
    // Predicated region
    $region22: #{my_model_forward.1} parent=1 // pred_check
      _
    $region23: #{my_model_forward.1} parent=1 // pred_check_branch
      %47 = sbr.rel (0) target = $region25
    $region24: #{my_model_forward.1} parent=1 // pred_region
      %49 = vsyncadd [#allocation5], 0
      %s50 = sshll.u32 %s5, 4
      %s51 = int_to_ptr.hbm [resolvable:$true] %s50
      %s52 = sshll.u32 [#allocation6], 4
      %s53 = int_to_ptr.vmem [resolvable:$true] %s52
      %58 = dma.hbm_to_vmem [thread:$0]  %s51, 8192, %s53, [#allocation5], 128, 128, 8
    $region25: #{my_model_forward.1} parent=1 // pred_fallthru
      _
    // Predicated region
    $region26: #{my_model_forward.1} parent=1 // pred_check
      _
    $region27: #{my_model_forward.1} parent=1 // pred_check_branch
      %60 = sbr.rel (0) target = $region29
    $region28: #{my_model_forward.1} parent=1 // pred_region
      _
    $region29: #{my_model_forward.1} parent=1 // pred_fallthru
      _
    // Predicated region
    $region30: #{my_model_forward.1} parent=1 // pred_check
      _
    $region31: #{my_model_forward.1} parent=1 // pred_check_branch
      %62 = sbr.rel (0) target = $region33
    $region32: #{my_model_forward.1} parent=1 // pred_region
      %64 = dma.done [#allocation3], 32768
    $region33: #{my_model_forward.1} parent=1 // pred_fallthru
      _
    // Predicated region
    $region34: #{my_model_forward.1} parent=1 // pred_check
      _
    $region35: #{my_model_forward.1} parent=1 // pred_check_branch
      %66 = sbr.rel (0) target = $region37
    $region36: #{my_model_forward.1} parent=1 // pred_region
      %68 = dma.done [#allocation5], 32768
    $region37: #{my_model_forward.1} parent=1 // pred_fallthru
      _
    // Predicated region
    $region38: #{my_model_forward.1} parent=1 // pred_check
      _
    $region39: #{my_model_forward.1} parent=1 // pred_check_branch
      %70 = sbr.rel (0) target = $region41
    $region40: #{my_model_forward.1} parent=1 // pred_region
      %72 = dma.done [#allocation5], 8192
    $region41: #{my_model_forward.1} parent=1 // pred_fallthru
      _
    %v73 = vld [vmem:[%s0] sm:$0xff]
    %v74 = vld [vmem:[%s0 + $0x8] sm:$0xff]
    %v75 = vld [vmem:[%s0 + $0x10] sm:$0xff]
    %v76 = vld [vmem:[%s0 + $0x18] sm:$0xff]
    %v77 = vld [vmem:[#allocation2] sm:$0xff]
    %v78 = vld [vmem:[#allocation2 + $0x8] sm:$0xff]
    %v79 = vld [vmem:[#allocation2 + $0x10] sm:$0xff]
    %v80 = vld [vmem:[#allocation2 + $0x18] sm:$0xff]
    %v81 = vld [vmem:[#allocation2 + $0x20] sm:$0xff]
    %v82 = vld [vmem:[#allocation2 + $0x28] sm:$0xff]
    %v83 = vld [vmem:[#allocation2 + $0x30] sm:$0xff]
    %v84 = vld [vmem:[#allocation2 + $0x38] sm:$0xff]
    %v85 = vld [vmem:[#allocation2 + $0x40] sm:$0xff]
    %v86 = vld [vmem:[#allocation2 + $0x48] sm:$0xff]
    %v87 = vld [vmem:[#allocation2 + $0x50] sm:$0xff]
    %v88 = vld [vmem:[#allocation2 + $0x58] sm:$0xff]
    %v89 = vld [vmem:[#allocation2 + $0x60] sm:$0xff]
    %v90 = vld [vmem:[#allocation2 + $0x68] sm:$0xff]
    %v91 = vld [vmem:[#allocation2 + $0x70] sm:$0xff]
    %v92 = vld [vmem:[#allocation2 + $0x78] sm:$0xff]
    %v93 = vld [vmem:[#allocation2 + $0x80] sm:$0xff]
    %v94 = vld [vmem:[#allocation2 + $0x88] sm:$0xff]
    %v95 = vld [vmem:[#allocation2 + $0x90] sm:$0xff]
    %v96 = vld [vmem:[#allocation2 + $0x98] sm:$0xff]
    %v97 = vld [vmem:[#allocation2 + $0xa0] sm:$0xff]
    %v98 = vld [vmem:[#allocation2 + $0xa8] sm:$0xff]
    %v99 = vld [vmem:[#allocation2 + $0xb0] sm:$0xff]
    %v100 = vld [vmem:[#allocation2 + $0xb8] sm:$0xff]
    %v101 = vld [vmem:[#allocation2 + $0xc0] sm:$0xff]
    %v102 = vld [vmem:[#allocation2 + $0xc8] sm:$0xff]
    %v103 = vld [vmem:[#allocation2 + $0xd0] sm:$0xff]
    %v104 = vld [vmem:[#allocation2 + $0xd8] sm:$0xff]
    %v105 = vld [vmem:[#allocation2 + $0xe0] sm:$0xff]
    %v106 = vld [vmem:[#allocation2 + $0xe8] sm:$0xff]
    %v107 = vld [vmem:[#allocation2 + $0xf0] sm:$0xff]
    %v108 = vld [vmem:[#allocation2 + $0xf8] sm:$0xff]
    %v109 = vld [vmem:[#allocation2 + $0x100] sm:$0xff]
    %v110 = vld [vmem:[#allocation2 + $0x108] sm:$0xff]
    %v111 = vld [vmem:[#allocation2 + $0x110] sm:$0xff]
    %v112 = vld [vmem:[#allocation2 + $0x118] sm:$0xff]
    %v113 = vld [vmem:[#allocation2 + $0x120] sm:$0xff]
    %v114 = vld [vmem:[#allocation2 + $0x128] sm:$0xff]
    %v115 = vld [vmem:[#allocation2 + $0x130] sm:$0xff]
    %v116 = vld [vmem:[#allocation2 + $0x138] sm:$0xff]
    %v117 = vld [vmem:[#allocation2 + $0x140] sm:$0xff]
    %v118 = vld [vmem:[#allocation2 + $0x148] sm:$0xff]
    %v119 = vld [vmem:[#allocation2 + $0x150] sm:$0xff]
    %v120 = vld [vmem:[#allocation2 + $0x158] sm:$0xff]
    %v121 = vld [vmem:[#allocation2 + $0x160] sm:$0xff]
    %v122 = vld [vmem:[#allocation2 + $0x168] sm:$0xff]
    %v123 = vld [vmem:[#allocation2 + $0x170] sm:$0xff]
    %v124 = vld [vmem:[#allocation2 + $0x178] sm:$0xff]
    %v125 = vld [vmem:[#allocation2 + $0x180] sm:$0xff]
    %v126 = vld [vmem:[#allocation2 + $0x188] sm:$0xff]
    %v127 = vld [vmem:[#allocation2 + $0x190] sm:$0xff]
    %v128 = vld [vmem:[#allocation2 + $0x198] sm:$0xff]
    %v129 = vld [vmem:[#allocation2 + $0x1a0] sm:$0xff]
    %v130 = vld [vmem:[#allocation2 + $0x1a8] sm:$0xff]
    %v131 = vld [vmem:[#allocation2 + $0x1b0] sm:$0xff]
    %v132 = vld [vmem:[#allocation2 + $0x1b8] sm:$0xff]
    %v133 = vld [vmem:[#allocation2 + $0x1c0] sm:$0xff]
    %v134 = vld [vmem:[#allocation2 + $0x1c8] sm:$0xff]
    %v135 = vld [vmem:[#allocation2 + $0x1d0] sm:$0xff]
    %v136 = vld [vmem:[#allocation2 + $0x1d8] sm:$0xff]
    %v137 = vld [vmem:[#allocation2 + $0x1e0] sm:$0xff]
    %v138 = vld [vmem:[#allocation2 + $0x1e8] sm:$0xff]
    %v139 = vld [vmem:[#allocation2 + $0x1f0] sm:$0xff]
    %v140 = vld [vmem:[#allocation2 + $0x1f8] sm:$0xff]
    %v141 = vld [vmem:[#allocation2 + $0x200] sm:$0xff]
    %v142 = vld [vmem:[#allocation2 + $0x208] sm:$0xff]
    %v143 = vld [vmem:[#allocation2 + $0x210] sm:$0xff]
    %v144 = vld [vmem:[#allocation2 + $0x218] sm:$0xff]
    %v145 = vld [vmem:[#allocation2 + $0x220] sm:$0xff]
    %v146 = vld [vmem:[#allocation2 + $0x228] sm:$0xff]
    %v147 = vld [vmem:[#allocation2 + $0x230] sm:$0xff]
    %v148 = vld [vmem:[#allocation2 + $0x238] sm:$0xff]
    %v149 = vld [vmem:[#allocation2 + $0x240] sm:$0xff]
    %v150 = vld [vmem:[#allocation2 + $0x248] sm:$0xff]
    %v151 = vld [vmem:[#allocation2 + $0x250] sm:$0xff]
    %v152 = vld [vmem:[#allocation2 + $0x258] sm:$0xff]
    %v153 = vld [vmem:[#allocation2 + $0x260] sm:$0xff]
    %v154 = vld [vmem:[#allocation2 + $0x268] sm:$0xff]
    %v155 = vld [vmem:[#allocation2 + $0x270] sm:$0xff]
    %v156 = vld [vmem:[#allocation2 + $0x278] sm:$0xff]
    %v157 = vld [vmem:[#allocation2 + $0x280] sm:$0xff]
    %v158 = vld [vmem:[#allocation2 + $0x288] sm:$0xff]
    %v159 = vld [vmem:[#allocation2 + $0x290] sm:$0xff]
    %v160 = vld [vmem:[#allocation2 + $0x298] sm:$0xff]
    %v161 = vld [vmem:[#allocation2 + $0x2a0] sm:$0xff]
    %v162 = vld [vmem:[#allocation2 + $0x2a8] sm:$0xff]
    %v163 = vld [vmem:[#allocation2 + $0x2b0] sm:$0xff]
    %v164 = vld [vmem:[#allocation2 + $0x2b8] sm:$0xff]
    %v165 = vld [vmem:[#allocation2 + $0x2c0] sm:$0xff]
    %v166 = vld [vmem:[#allocation2 + $0x2c8] sm:$0xff]
    %v167 = vld [vmem:[#allocation2 + $0x2d0] sm:$0xff]
    %v168 = vld [vmem:[#allocation2 + $0x2d8] sm:$0xff]
    %v169 = vld [vmem:[#allocation2 + $0x2e0] sm:$0xff]
    %v170 = vld [vmem:[#allocation2 + $0x2e8] sm:$0xff]
    %v171 = vld [vmem:[#allocation2 + $0x2f0] sm:$0xff]
    %v172 = vld [vmem:[#allocation2 + $0x2f8] sm:$0xff]
    %v173 = vld [vmem:[#allocation2 + $0x300] sm:$0xff]
    %v174 = vld [vmem:[#allocation2 + $0x308] sm:$0xff]
    %v175 = vld [vmem:[#allocation2 + $0x310] sm:$0xff]
    %v176 = vld [vmem:[#allocation2 + $0x318] sm:$0xff]
    %v177 = vld [vmem:[#allocation2 + $0x320] sm:$0xff]
    %v178 = vld [vmem:[#allocation2 + $0x328] sm:$0xff]
    %v179 = vld [vmem:[#allocation2 + $0x330] sm:$0xff]
    %v180 = vld [vmem:[#allocation2 + $0x338] sm:$0xff]
    %v181 = vld [vmem:[#allocation2 + $0x340] sm:$0xff]
    %v182 = vld [vmem:[#allocation2 + $0x348] sm:$0xff]
    %v183 = vld [vmem:[#allocation2 + $0x350] sm:$0xff]
    %v184 = vld [vmem:[#allocation2 + $0x358] sm:$0xff]
    %v185 = vld [vmem:[#allocation2 + $0x360] sm:$0xff]
    %v186 = vld [vmem:[#allocation2 + $0x368] sm:$0xff]
    %v187 = vld [vmem:[#allocation2 + $0x370] sm:$0xff]
    %v188 = vld [vmem:[#allocation2 + $0x378] sm:$0xff]
    %v189 = vld [vmem:[#allocation2 + $0x380] sm:$0xff]
    %v190 = vld [vmem:[#allocation2 + $0x388] sm:$0xff]
    %v191 = vld [vmem:[#allocation2 + $0x390] sm:$0xff]
    %v192 = vld [vmem:[#allocation2 + $0x398] sm:$0xff]
    %v193 = vld [vmem:[#allocation2 + $0x3a0] sm:$0xff]
    %v194 = vld [vmem:[#allocation2 + $0x3a8] sm:$0xff]
    %v195 = vld [vmem:[#allocation2 + $0x3b0] sm:$0xff]
    %v196 = vld [vmem:[#allocation2 + $0x3b8] sm:$0xff]
    %v197 = vld [vmem:[#allocation2 + $0x3c0] sm:$0xff]
    %v198 = vld [vmem:[#allocation2 + $0x3c8] sm:$0xff]
    %v199 = vld [vmem:[#allocation2 + $0x3d0] sm:$0xff]
    %v200 = vld [vmem:[#allocation2 + $0x3d8] sm:$0xff]
    %v201 = vld [vmem:[#allocation2 + $0x3e0] sm:$0xff]
    %v202 = vld [vmem:[#allocation2 + $0x3e8] sm:$0xff]
    %v203 = vld [vmem:[#allocation2 + $0x3f0] sm:$0xff]
    %v204 = vld [vmem:[#allocation2 + $0x3f8] sm:$0xff]
    %v205 = vld [vmem:[#allocation2 + $0x400] sm:$0xff]
    %v206 = vld [vmem:[#allocation2 + $0x408] sm:$0xff]
    %v207 = vld [vmem:[#allocation2 + $0x410] sm:$0xff]
    %v208 = vld [vmem:[#allocation2 + $0x418] sm:$0xff]
    %v209 = vld [vmem:[#allocation2 + $0x420] sm:$0xff]
    %v210 = vld [vmem:[#allocation2 + $0x428] sm:$0xff]
    %v211 = vld [vmem:[#allocation2 + $0x430] sm:$0xff]
    %v212 = vld [vmem:[#allocation2 + $0x438] sm:$0xff]
    %v213 = vld [vmem:[#allocation2 + $0x440] sm:$0xff]
    %v214 = vld [vmem:[#allocation2 + $0x448] sm:$0xff]
    %v215 = vld [vmem:[#allocation2 + $0x450] sm:$0xff]
    %v216 = vld [vmem:[#allocation2 + $0x458] sm:$0xff]
    %v217 = vld [vmem:[#allocation2 + $0x460] sm:$0xff]
    %v218 = vld [vmem:[#allocation2 + $0x468] sm:$0xff]
    %v219 = vld [vmem:[#allocation2 + $0x470] sm:$0xff]
    %v220 = vld [vmem:[#allocation2 + $0x478] sm:$0xff]
    %v221 = vld [vmem:[#allocation2 + $0x480] sm:$0xff]
    %v222 = vld [vmem:[#allocation2 + $0x488] sm:$0xff]
    %v223 = vld [vmem:[#allocation2 + $0x490] sm:$0xff]
    %v224 = vld [vmem:[#allocation2 + $0x498] sm:$0xff]
    %v225 = vld [vmem:[#allocation2 + $0x4a0] sm:$0xff]
    %v226 = vld [vmem:[#allocation2 + $0x4a8] sm:$0xff]
    %v227 = vld [vmem:[#allocation2 + $0x4b0] sm:$0xff]
    %v228 = vld [vmem:[#allocation2 + $0x4b8] sm:$0xff]
    %v229 = vld [vmem:[#allocation2 + $0x4c0] sm:$0xff]
    %v230 = vld [vmem:[#allocation2 + $0x4c8] sm:$0xff]
    %v231 = vld [vmem:[#allocation2 + $0x4d0] sm:$0xff]
    %v232 = vld [vmem:[#allocation2 + $0x4d8] sm:$0xff]
    %v233 = vld [vmem:[#allocation2 + $0x4e0] sm:$0xff]
    %v234 = vld [vmem:[#allocation2 + $0x4e8] sm:$0xff]
    %v235 = vld [vmem:[#allocation2 + $0x4f0] sm:$0xff]
    %v236 = vld [vmem:[#allocation2 + $0x4f8] sm:$0xff]
    %v237 = vld [vmem:[#allocation2 + $0x500] sm:$0xff]
    %v238 = vld [vmem:[#allocation2 + $0x508] sm:$0xff]
    %v239 = vld [vmem:[#allocation2 + $0x510] sm:$0xff]
    %v240 = vld [vmem:[#allocation2 + $0x518] sm:$0xff]
    %v241 = vld [vmem:[#allocation2 + $0x520] sm:$0xff]
    %v242 = vld [vmem:[#allocation2 + $0x528] sm:$0xff]
    %v243 = vld [vmem:[#allocation2 + $0x530] sm:$0xff]
    %v244 = vld [vmem:[#allocation2 + $0x538] sm:$0xff]
    %v245 = vld [vmem:[#allocation2 + $0x540] sm:$0xff]
    %v246 = vld [vmem:[#allocation2 + $0x548] sm:$0xff]
    %v247 = vld [vmem:[#allocation2 + $0x550] sm:$0xff]
    %v248 = vld [vmem:[#allocation2 + $0x558] sm:$0xff]
    %v249 = vld [vmem:[#allocation2 + $0x560] sm:$0xff]
    %v250 = vld [vmem:[#allocation2 + $0x568] sm:$0xff]
    %v251 = vld [vmem:[#allocation2 + $0x570] sm:$0xff]
    %v252 = vld [vmem:[#allocation2 + $0x578] sm:$0xff]
    %v253 = vld [vmem:[#allocation2 + $0x580] sm:$0xff]
    %v254 = vld [vmem:[#allocation2 + $0x588] sm:$0xff]
    %v255 = vld [vmem:[#allocation2 + $0x590] sm:$0xff]
    %v256 = vld [vmem:[#allocation2 + $0x598] sm:$0xff]
    %v257 = vld [vmem:[#allocation2 + $0x5a0] sm:$0xff]
    %v258 = vld [vmem:[#allocation2 + $0x5a8] sm:$0xff]
    %v259 = vld [vmem:[#allocation2 + $0x5b0] sm:$0xff]
    %v260 = vld [vmem:[#allocation2 + $0x5b8] sm:$0xff]
    %v261 = vld [vmem:[#allocation2 + $0x5c0] sm:$0xff]
    %v262 = vld [vmem:[#allocation2 + $0x5c8] sm:$0xff]
    %v263 = vld [vmem:[#allocation2 + $0x5d0] sm:$0xff]
    %v264 = vld [vmem:[#allocation2 + $0x5d8] sm:$0xff]
    %v265 = vld [vmem:[#allocation2 + $0x5e0] sm:$0xff]
    %v266 = vld [vmem:[#allocation2 + $0x5e8] sm:$0xff]
    %v267 = vld [vmem:[#allocation2 + $0x5f0] sm:$0xff]
    %v268 = vld [vmem:[#allocation2 + $0x5f8] sm:$0xff]
    %v269 = vld [vmem:[#allocation2 + $0x600] sm:$0xff]
    %v270 = vld [vmem:[#allocation2 + $0x608] sm:$0xff]
    %v271 = vld [vmem:[#allocation2 + $0x610] sm:$0xff]
    %v272 = vld [vmem:[#allocation2 + $0x618] sm:$0xff]
    %v273 = vld [vmem:[#allocation2 + $0x620] sm:$0xff]
    %v274 = vld [vmem:[#allocation2 + $0x628] sm:$0xff]
    %v275 = vld [vmem:[#allocation2 + $0x630] sm:$0xff]
    %v276 = vld [vmem:[#allocation2 + $0x638] sm:$0xff]
    %v277 = vld [vmem:[#allocation2 + $0x640] sm:$0xff]
    %v278 = vld [vmem:[#allocation2 + $0x648] sm:$0xff]
    %v279 = vld [vmem:[#allocation2 + $0x650] sm:$0xff]
    %v280 = vld [vmem:[#allocation2 + $0x658] sm:$0xff]
    %v281 = vld [vmem:[#allocation2 + $0x660] sm:$0xff]
    %v282 = vld [vmem:[#allocation2 + $0x668] sm:$0xff]
    %v283 = vld [vmem:[#allocation2 + $0x670] sm:$0xff]
    %v284 = vld [vmem:[#allocation2 + $0x678] sm:$0xff]
    %v285 = vld [vmem:[#allocation2 + $0x680] sm:$0xff]
    %v286 = vld [vmem:[#allocation2 + $0x688] sm:$0xff]
    %v287 = vld [vmem:[#allocation2 + $0x690] sm:$0xff]
    %v288 = vld [vmem:[#allocation2 + $0x698] sm:$0xff]
    %v289 = vld [vmem:[#allocation2 + $0x6a0] sm:$0xff]
    %v290 = vld [vmem:[#allocation2 + $0x6a8] sm:$0xff]
    %v291 = vld [vmem:[#allocation2 + $0x6b0] sm:$0xff]
    %v292 = vld [vmem:[#allocation2 + $0x6b8] sm:$0xff]
    %v293 = vld [vmem:[#allocation2 + $0x6c0] sm:$0xff]
    %v294 = vld [vmem:[#allocation2 + $0x6c8] sm:$0xff]
    %v295 = vld [vmem:[#allocation2 + $0x6d0] sm:$0xff]
    %v296 = vld [vmem:[#allocation2 + $0x6d8] sm:$0xff]
    %v297 = vld [vmem:[#allocation2 + $0x6e0] sm:$0xff]
    %v298 = vld [vmem:[#allocation2 + $0x6e8] sm:$0xff]
    %v299 = vld [vmem:[#allocation2 + $0x6f0] sm:$0xff]
    %v300 = vld [vmem:[#allocation2 + $0x6f8] sm:$0xff]
    %v301 = vld [vmem:[#allocation2 + $0x700] sm:$0xff]
    %v302 = vld [vmem:[#allocation2 + $0x708] sm:$0xff]
    %v303 = vld [vmem:[#allocation2 + $0x710] sm:$0xff]
    %v304 = vld [vmem:[#allocation2 + $0x718] sm:$0xff]
    %v305 = vld [vmem:[#allocation2 + $0x720] sm:$0xff]
    %v306 = vld [vmem:[#allocation2 + $0x728] sm:$0xff]
    %v307 = vld [vmem:[#allocation2 + $0x730] sm:$0xff]
    %v308 = vld [vmem:[#allocation2 + $0x738] sm:$0xff]
    %v309 = vld [vmem:[#allocation2 + $0x740] sm:$0xff]
    %v310 = vld [vmem:[#allocation2 + $0x748] sm:$0xff]
    %v311 = vld [vmem:[#allocation2 + $0x750] sm:$0xff]
    %v312 = vld [vmem:[#allocation2 + $0x758] sm:$0xff]
    %v313 = vld [vmem:[#allocation2 + $0x760] sm:$0xff]
    %v314 = vld [vmem:[#allocation2 + $0x768] sm:$0xff]
    %v315 = vld [vmem:[#allocation2 + $0x770] sm:$0xff]
    %v316 = vld [vmem:[#allocation2 + $0x778] sm:$0xff]
    %v317 = vld [vmem:[#allocation2 + $0x780] sm:$0xff]
    %v318 = vld [vmem:[#allocation2 + $0x788] sm:$0xff]
    %v319 = vld [vmem:[#allocation2 + $0x790] sm:$0xff]
    %v320 = vld [vmem:[#allocation2 + $0x798] sm:$0xff]
    %v321 = vld [vmem:[#allocation2 + $0x7a0] sm:$0xff]
    %v322 = vld [vmem:[#allocation2 + $0x7a8] sm:$0xff]
    %v323 = vld [vmem:[#allocation2 + $0x7b0] sm:$0xff]
    %v324 = vld [vmem:[#allocation2 + $0x7b8] sm:$0xff]
    %v325 = vld [vmem:[#allocation2 + $0x7c0] sm:$0xff]
    %v326 = vld [vmem:[#allocation2 + $0x7c8] sm:$0xff]
    %v327 = vld [vmem:[#allocation2 + $0x7d0] sm:$0xff]
    %v328 = vld [vmem:[#allocation2 + $0x7d8] sm:$0xff]
    %v329 = vld [vmem:[#allocation2 + $0x7e0] sm:$0xff]
    %v330 = vld [vmem:[#allocation2 + $0x7e8] sm:$0xff]
    %v331 = vld [vmem:[#allocation2 + $0x7f0] sm:$0xff]
    %v332 = vld [vmem:[#allocation2 + $0x7f8] sm:$0xff]
    %v333 = vld [vmem:[%s2] sm:$0xf]
    %v335 = vperm.slane %v333, 0
    %v336 = vperm.slane %v333, 1
    %v337 = vperm.slane %v333, 2
    %v338 = vperm.slane %v333, 3
    %343 = vmatpush.msra.mxu0 %v137
    %344 = vmatpush.msra.mxu0 %v133
    %345 = vmatpush.msra.mxu0 %v129
    %346 = vmatpush.msra.mxu0 %v125
    %347 = vmatpush.msra.mxu0 %v121
    %348 = vmatpush.msra.mxu0 %v117
    %349 = vmatpush.msra.mxu0 %v113
    %350 = vmatpush.msra.mxu0 %v109
    %351 = vmatpush.msra.mxu0 %v105
    %352 = vmatpush.msra.mxu0 %v101
    %353 = vmatpush.msra.mxu0 %v97
    %354 = vmatpush.msra.mxu0 %v93
    %355 = vmatpush.msra.mxu0 %v89
    %356 = vmatpush.msra.mxu0 %v85
    %357 = vmatpush.msra.mxu0 %v81
    %358 = vmatpush.msra.mxu0 %v77
    %359 = vmatmul.f32.gmra.mxu0 %v73
    %v360 = vpop.f32.mrf.mxu0
    %v361 = vadd.f32 %v335, %v360
    %362 = vdwg.mxu0
    %363 = vmatpush.msra.mxu0 %v201
    %364 = vmatpush.msra.mxu0 %v197
    %365 = vmatpush.msra.mxu0 %v193
    %366 = vmatpush.msra.mxu0 %v189
    %367 = vmatpush.msra.mxu0 %v185
    %368 = vmatpush.msra.mxu0 %v181
    %369 = vmatpush.msra.mxu0 %v177
    %370 = vmatpush.msra.mxu0 %v173
    %371 = vmatpush.msra.mxu0 %v169
    %372 = vmatpush.msra.mxu0 %v165
    %373 = vmatpush.msra.mxu0 %v161
    %374 = vmatpush.msra.mxu0 %v157
    %375 = vmatpush.msra.mxu0 %v153
    %376 = vmatpush.msra.mxu0 %v149
    %377 = vmatpush.msra.mxu0 %v145
    %378 = vmatpush.msra.mxu0 %v141
    %379 = vmatmul.f32.gmra.mxu0 %v74
    %v380 = vpop.f32.mrf.mxu0
    %v381 = vadd.f32 %v361, %v380
    %382 = vdwg.mxu0
    %383 = vmatpush.msra.mxu0 %v265
    %384 = vmatpush.msra.mxu0 %v261
    %385 = vmatpush.msra.mxu0 %v257
    %386 = vmatpush.msra.mxu0 %v253
    %387 = vmatpush.msra.mxu0 %v249
    %388 = vmatpush.msra.mxu0 %v245
    %389 = vmatpush.msra.mxu0 %v241
    %390 = vmatpush.msra.mxu0 %v237
    %391 = vmatpush.msra.mxu0 %v233
    %392 = vmatpush.msra.mxu0 %v229
    %393 = vmatpush.msra.mxu0 %v225
    %394 = vmatpush.msra.mxu0 %v221
    %395 = vmatpush.msra.mxu0 %v217
    %396 = vmatpush.msra.mxu0 %v213
    %397 = vmatpush.msra.mxu0 %v209
    %398 = vmatpush.msra.mxu0 %v205
    %399 = vmatmul.f32.gmra.mxu0 %v75
    %v400 = vpop.f32.mrf.mxu0
    %v401 = vadd.f32 %v381, %v400
    %402 = vdwg.mxu0
    %403 = vmatpush.msra.mxu0 %v329
    %404 = vmatpush.msra.mxu0 %v325
    %405 = vmatpush.msra.mxu0 %v321
    %406 = vmatpush.msra.mxu0 %v317
    %407 = vmatpush.msra.mxu0 %v313
    %408 = vmatpush.msra.mxu0 %v309
    %409 = vmatpush.msra.mxu0 %v305
    %410 = vmatpush.msra.mxu0 %v301
    %411 = vmatpush.msra.mxu0 %v297
    %412 = vmatpush.msra.mxu0 %v293
    %413 = vmatpush.msra.mxu0 %v289
    %414 = vmatpush.msra.mxu0 %v285
    %415 = vmatpush.msra.mxu0 %v281
    %416 = vmatpush.msra.mxu0 %v277
    %417 = vmatpush.msra.mxu0 %v273
    %418 = vmatpush.msra.mxu0 %v269
    %419 = vmatmul.f32.gmra.mxu0 %v76
    %v420 = vpop.f32.mrf.mxu0
    %v421 = vadd.f32 %v401, %v420
    %422 = vdwg.mxu0
    %423 = vmatpush.msra.mxu0 %v138
    %424 = vmatpush.msra.mxu0 %v134
    %425 = vmatpush.msra.mxu0 %v130
    %426 = vmatpush.msra.mxu0 %v126
    %427 = vmatpush.msra.mxu0 %v122
    %428 = vmatpush.msra.mxu0 %v118
    %429 = vmatpush.msra.mxu0 %v114
    %430 = vmatpush.msra.mxu0 %v110
    %431 = vmatpush.msra.mxu0 %v106
    %432 = vmatpush.msra.mxu0 %v102
    %433 = vmatpush.msra.mxu0 %v98
    %434 = vmatpush.msra.mxu0 %v94
    %435 = vmatpush.msra.mxu0 %v90
    %436 = vmatpush.msra.mxu0 %v86
    %437 = vmatpush.msra.mxu0 %v82
    %438 = vmatpush.msra.mxu0 %v78
    %439 = vmatmul.f32.gmra.mxu0 %v73
    %v440 = vpop.f32.mrf.mxu0
    %v441 = vadd.f32 %v336, %v440
    %442 = vdwg.mxu0
    %443 = vmatpush.msra.mxu0 %v202
    %444 = vmatpush.msra.mxu0 %v198
    %445 = vmatpush.msra.mxu0 %v194
    %446 = vmatpush.msra.mxu0 %v190
    %447 = vmatpush.msra.mxu0 %v186
    %448 = vmatpush.msra.mxu0 %v182
    %449 = vmatpush.msra.mxu0 %v178
    %450 = vmatpush.msra.mxu0 %v174
    %451 = vmatpush.msra.mxu0 %v170
    %452 = vmatpush.msra.mxu0 %v166
    %453 = vmatpush.msra.mxu0 %v162
    %454 = vmatpush.msra.mxu0 %v158
    %455 = vmatpush.msra.mxu0 %v154
    %456 = vmatpush.msra.mxu0 %v150
    %457 = vmatpush.msra.mxu0 %v146
    %458 = vmatpush.msra.mxu0 %v142
    %459 = vmatmul.f32.gmra.mxu0 %v74
    %v460 = vpop.f32.mrf.mxu0
    %v461 = vadd.f32 %v441, %v460
    %462 = vdwg.mxu0
    %463 = vmatpush.msra.mxu0 %v266
    %464 = vmatpush.msra.mxu0 %v262
    %465 = vmatpush.msra.mxu0 %v258
    %466 = vmatpush.msra.mxu0 %v254
    %467 = vmatpush.msra.mxu0 %v250
    %468 = vmatpush.msra.mxu0 %v246
    %469 = vmatpush.msra.mxu0 %v242
    %470 = vmatpush.msra.mxu0 %v238
    %471 = vmatpush.msra.mxu0 %v234
    %472 = vmatpush.msra.mxu0 %v230
    %473 = vmatpush.msra.mxu0 %v226
    %474 = vmatpush.msra.mxu0 %v222
    %475 = vmatpush.msra.mxu0 %v218
    %476 = vmatpush.msra.mxu0 %v214
    %477 = vmatpush.msra.mxu0 %v210
    %478 = vmatpush.msra.mxu0 %v206
    %479 = vmatmul.f32.gmra.mxu0 %v75
    %v480 = vpop.f32.mrf.mxu0
    %v481 = vadd.f32 %v461, %v480
    %482 = vdwg.mxu0
    %483 = vmatpush.msra.mxu0 %v330
    %484 = vmatpush.msra.mxu0 %v326
    %485 = vmatpush.msra.mxu0 %v322
    %486 = vmatpush.msra.mxu0 %v318
    %487 = vmatpush.msra.mxu0 %v314
    %488 = vmatpush.msra.mxu0 %v310
    %489 = vmatpush.msra.mxu0 %v306
    %490 = vmatpush.msra.mxu0 %v302
    %491 = vmatpush.msra.mxu0 %v298
    %492 = vmatpush.msra.mxu0 %v294
    %493 = vmatpush.msra.mxu0 %v290
    %494 = vmatpush.msra.mxu0 %v286
    %495 = vmatpush.msra.mxu0 %v282
    %496 = vmatpush.msra.mxu0 %v278
    %497 = vmatpush.msra.mxu0 %v274
    %498 = vmatpush.msra.mxu0 %v270
    %499 = vmatmul.f32.gmra.mxu0 %v76
    %v500 = vpop.f32.mrf.mxu0
    %v501 = vadd.f32 %v481, %v500
    %502 = vdwg.mxu0
    %503 = vmatpush.msra.mxu0 %v139
    %504 = vmatpush.msra.mxu0 %v135
    %505 = vmatpush.msra.mxu0 %v131
    %506 = vmatpush.msra.mxu0 %v127
    %507 = vmatpush.msra.mxu0 %v123
    %508 = vmatpush.msra.mxu0 %v119
    %509 = vmatpush.msra.mxu0 %v115
    %510 = vmatpush.msra.mxu0 %v111
    %511 = vmatpush.msra.mxu0 %v107
    %512 = vmatpush.msra.mxu0 %v103
    %513 = vmatpush.msra.mxu0 %v99
    %514 = vmatpush.msra.mxu0 %v95
    %515 = vmatpush.msra.mxu0 %v91
    %516 = vmatpush.msra.mxu0 %v87
    %517 = vmatpush.msra.mxu0 %v83
    %518 = vmatpush.msra.mxu0 %v79
    %519 = vmatmul.f32.gmra.mxu0 %v73
    %v520 = vpop.f32.mrf.mxu0
    %v521 = vadd.f32 %v337, %v520
    %522 = vdwg.mxu0
    %523 = vmatpush.msra.mxu0 %v203
    %524 = vmatpush.msra.mxu0 %v199
    %525 = vmatpush.msra.mxu0 %v195
    %526 = vmatpush.msra.mxu0 %v191
    %527 = vmatpush.msra.mxu0 %v187
    %528 = vmatpush.msra.mxu0 %v183
    %529 = vmatpush.msra.mxu0 %v179
    %530 = vmatpush.msra.mxu0 %v175
    %531 = vmatpush.msra.mxu0 %v171
    %532 = vmatpush.msra.mxu0 %v167
    %533 = vmatpush.msra.mxu0 %v163
    %534 = vmatpush.msra.mxu0 %v159
    %535 = vmatpush.msra.mxu0 %v155
    %536 = vmatpush.msra.mxu0 %v151
    %537 = vmatpush.msra.mxu0 %v147
    %538 = vmatpush.msra.mxu0 %v143
    %539 = vmatmul.f32.gmra.mxu0 %v74
    %v540 = vpop.f32.mrf.mxu0
    %v541 = vadd.f32 %v521, %v540
    %542 = vdwg.mxu0
    %543 = vmatpush.msra.mxu0 %v267
    %544 = vmatpush.msra.mxu0 %v263
    %545 = vmatpush.msra.mxu0 %v259
    %546 = vmatpush.msra.mxu0 %v255
    %547 = vmatpush.msra.mxu0 %v251
    %548 = vmatpush.msra.mxu0 %v247
    %549 = vmatpush.msra.mxu0 %v243
    %550 = vmatpush.msra.mxu0 %v239
    %551 = vmatpush.msra.mxu0 %v235
    %552 = vmatpush.msra.mxu0 %v231
    %553 = vmatpush.msra.mxu0 %v227
    %554 = vmatpush.msra.mxu0 %v223
    %555 = vmatpush.msra.mxu0 %v219
    %556 = vmatpush.msra.mxu0 %v215
    %557 = vmatpush.msra.mxu0 %v211
    %558 = vmatpush.msra.mxu0 %v207
    %559 = vmatmul.f32.gmra.mxu0 %v75
    %v560 = vpop.f32.mrf.mxu0
    %v561 = vadd.f32 %v541, %v560
    %562 = vdwg.mxu0
    %563 = vmatpush.msra.mxu0 %v331
    %564 = vmatpush.msra.mxu0 %v327
    %565 = vmatpush.msra.mxu0 %v323
    %566 = vmatpush.msra.mxu0 %v319
    %567 = vmatpush.msra.mxu0 %v315
    %568 = vmatpush.msra.mxu0 %v311
    %569 = vmatpush.msra.mxu0 %v307
    %570 = vmatpush.msra.mxu0 %v303
    %571 = vmatpush.msra.mxu0 %v299
    %572 = vmatpush.msra.mxu0 %v295
    %573 = vmatpush.msra.mxu0 %v291
    %574 = vmatpush.msra.mxu0 %v287
    %575 = vmatpush.msra.mxu0 %v283
    %576 = vmatpush.msra.mxu0 %v279
    %577 = vmatpush.msra.mxu0 %v275
    %578 = vmatpush.msra.mxu0 %v271
    %579 = vmatmul.f32.gmra.mxu0 %v76
    %v580 = vpop.f32.mrf.mxu0
    %v581 = vadd.f32 %v561, %v580
    %582 = vdwg.mxu0
    %583 = vmatpush.msra.mxu0 %v140
    %584 = vmatpush.msra.mxu0 %v136
    %585 = vmatpush.msra.mxu0 %v132
    %586 = vmatpush.msra.mxu0 %v128
    %587 = vmatpush.msra.mxu0 %v124
    %588 = vmatpush.msra.mxu0 %v120
    %589 = vmatpush.msra.mxu0 %v116
    %590 = vmatpush.msra.mxu0 %v112
    %591 = vmatpush.msra.mxu0 %v108
    %592 = vmatpush.msra.mxu0 %v104
    %593 = vmatpush.msra.mxu0 %v100
    %594 = vmatpush.msra.mxu0 %v96
    %595 = vmatpush.msra.mxu0 %v92
    %596 = vmatpush.msra.mxu0 %v88
    %597 = vmatpush.msra.mxu0 %v84
    %598 = vmatpush.msra.mxu0 %v80
    %599 = vmatmul.f32.gmra.mxu0 %v73
    %v600 = vpop.f32.mrf.mxu0
    %v601 = vadd.f32 %v338, %v600
    %602 = vdwg.mxu0
    %603 = vmatpush.msra.mxu0 %v204
    %604 = vmatpush.msra.mxu0 %v200
    %605 = vmatpush.msra.mxu0 %v196
    %606 = vmatpush.msra.mxu0 %v192
    %607 = vmatpush.msra.mxu0 %v188
    %608 = vmatpush.msra.mxu0 %v184
    %609 = vmatpush.msra.mxu0 %v180
    %610 = vmatpush.msra.mxu0 %v176
    %611 = vmatpush.msra.mxu0 %v172
    %612 = vmatpush.msra.mxu0 %v168
    %613 = vmatpush.msra.mxu0 %v164
    %614 = vmatpush.msra.mxu0 %v160
    %615 = vmatpush.msra.mxu0 %v156
    %616 = vmatpush.msra.mxu0 %v152
    %617 = vmatpush.msra.mxu0 %v148
    %618 = vmatpush.msra.mxu0 %v144
    %619 = vmatmul.f32.gmra.mxu0 %v74
    %v620 = vpop.f32.mrf.mxu0
    %v621 = vadd.f32 %v601, %v620
    %622 = vdwg.mxu0
    %623 = vmatpush.msra.mxu0 %v268
    %624 = vmatpush.msra.mxu0 %v264
    %625 = vmatpush.msra.mxu0 %v260
    %626 = vmatpush.msra.mxu0 %v256
    %627 = vmatpush.msra.mxu0 %v252
    %628 = vmatpush.msra.mxu0 %v248
    %629 = vmatpush.msra.mxu0 %v244
    %630 = vmatpush.msra.mxu0 %v240
    %631 = vmatpush.msra.mxu0 %v236
    %632 = vmatpush.msra.mxu0 %v232
    %633 = vmatpush.msra.mxu0 %v228
    %634 = vmatpush.msra.mxu0 %v224
    %635 = vmatpush.msra.mxu0 %v220
    %636 = vmatpush.msra.mxu0 %v216
    %637 = vmatpush.msra.mxu0 %v212
    %638 = vmatpush.msra.mxu0 %v208
    %639 = vmatmul.f32.gmra.mxu0 %v75
    %v640 = vpop.f32.mrf.mxu0
    %v641 = vadd.f32 %v621, %v640
    %642 = vdwg.mxu0
    %643 = vmatpush.msra.mxu0 %v332
    %644 = vmatpush.msra.mxu0 %v328
    %645 = vmatpush.msra.mxu0 %v324
    %646 = vmatpush.msra.mxu0 %v320
    %647 = vmatpush.msra.mxu0 %v316
    %648 = vmatpush.msra.mxu0 %v312
    %649 = vmatpush.msra.mxu0 %v308
    %650 = vmatpush.msra.mxu0 %v304
    %651 = vmatpush.msra.mxu0 %v300
    %652 = vmatpush.msra.mxu0 %v296
    %653 = vmatpush.msra.mxu0 %v292
    %654 = vmatpush.msra.mxu0 %v288
    %655 = vmatpush.msra.mxu0 %v284
    %656 = vmatpush.msra.mxu0 %v280
    %657 = vmatpush.msra.mxu0 %v276
    %658 = vmatpush.msra.mxu0 %v272
    %659 = vmatmul.f32.gmra.mxu0 %v76
    %v660 = vpop.f32.mrf.mxu0
    %v661 = vadd.f32 %v641, %v660
    %662 = vdwg.mxu0
    %v663 = vmax.f32 %v421, 0.0
    %v664 = vmax.f32 %v501, 0.0
    %v665 = vmax.f32 %v581, 0.0
    %v666 = vmax.f32 %v661, 0.0
    %v667 = vld [vmem:[#allocation4] sm:$0xff]
    %v668 = vld [vmem:[#allocation4 + $0x8] sm:$0xff]
    %v669 = vld [vmem:[#allocation4 + $0x10] sm:$0xff]
    %v670 = vld [vmem:[#allocation4 + $0x18] sm:$0xff]
    %v671 = vld [vmem:[#allocation4 + $0x20] sm:$0xff]
    %v672 = vld [vmem:[#allocation4 + $0x28] sm:$0xff]
    %v673 = vld [vmem:[#allocation4 + $0x30] sm:$0xff]
    %v674 = vld [vmem:[#allocation4 + $0x38] sm:$0xff]
    %v675 = vld [vmem:[#allocation4 + $0x40] sm:$0xff]
    %v676 = vld [vmem:[#allocation4 + $0x48] sm:$0xff]
    %v677 = vld [vmem:[#allocation4 + $0x50] sm:$0xff]
    %v678 = vld [vmem:[#allocation4 + $0x58] sm:$0xff]
    %v679 = vld [vmem:[#allocation4 + $0x60] sm:$0xff]
    %v680 = vld [vmem:[#allocation4 + $0x68] sm:$0xff]
    %v681 = vld [vmem:[#allocation4 + $0x70] sm:$0xff]
    %v682 = vld [vmem:[#allocation4 + $0x78] sm:$0xff]
    %v683 = vld [vmem:[#allocation4 + $0x80] sm:$0xff]
    %v684 = vld [vmem:[#allocation4 + $0x88] sm:$0xff]
    %v685 = vld [vmem:[#allocation4 + $0x90] sm:$0xff]
    %v686 = vld [vmem:[#allocation4 + $0x98] sm:$0xff]
    %v687 = vld [vmem:[#allocation4 + $0xa0] sm:$0xff]
    %v688 = vld [vmem:[#allocation4 + $0xa8] sm:$0xff]
    %v689 = vld [vmem:[#allocation4 + $0xb0] sm:$0xff]
    %v690 = vld [vmem:[#allocation4 + $0xb8] sm:$0xff]
    %v691 = vld [vmem:[#allocation4 + $0xc0] sm:$0xff]
    %v692 = vld [vmem:[#allocation4 + $0xc8] sm:$0xff]
    %v693 = vld [vmem:[#allocation4 + $0xd0] sm:$0xff]
    %v694 = vld [vmem:[#allocation4 + $0xd8] sm:$0xff]
    %v695 = vld [vmem:[#allocation4 + $0xe0] sm:$0xff]
    %v696 = vld [vmem:[#allocation4 + $0xe8] sm:$0xff]
    %v697 = vld [vmem:[#allocation4 + $0xf0] sm:$0xff]
    %v698 = vld [vmem:[#allocation4 + $0xf8] sm:$0xff]
    %v699 = vld [vmem:[#allocation4 + $0x100] sm:$0xff]
    %v700 = vld [vmem:[#allocation4 + $0x108] sm:$0xff]
    %v701 = vld [vmem:[#allocation4 + $0x110] sm:$0xff]
    %v702 = vld [vmem:[#allocation4 + $0x118] sm:$0xff]
    %v703 = vld [vmem:[#allocation4 + $0x120] sm:$0xff]
    %v704 = vld [vmem:[#allocation4 + $0x128] sm:$0xff]
    %v705 = vld [vmem:[#allocation4 + $0x130] sm:$0xff]
    %v706 = vld [vmem:[#allocation4 + $0x138] sm:$0xff]
    %v707 = vld [vmem:[#allocation4 + $0x140] sm:$0xff]
    %v708 = vld [vmem:[#allocation4 + $0x148] sm:$0xff]
    %v709 = vld [vmem:[#allocation4 + $0x150] sm:$0xff]
    %v710 = vld [vmem:[#allocation4 + $0x158] sm:$0xff]
    %v711 = vld [vmem:[#allocation4 + $0x160] sm:$0xff]
    %v712 = vld [vmem:[#allocation4 + $0x168] sm:$0xff]
    %v713 = vld [vmem:[#allocation4 + $0x170] sm:$0xff]
    %v714 = vld [vmem:[#allocation4 + $0x178] sm:$0xff]
    %v715 = vld [vmem:[#allocation4 + $0x180] sm:$0xff]
    %v716 = vld [vmem:[#allocation4 + $0x188] sm:$0xff]
    %v717 = vld [vmem:[#allocation4 + $0x190] sm:$0xff]
    %v718 = vld [vmem:[#allocation4 + $0x198] sm:$0xff]
    %v719 = vld [vmem:[#allocation4 + $0x1a0] sm:$0xff]
    %v720 = vld [vmem:[#allocation4 + $0x1a8] sm:$0xff]
    %v721 = vld [vmem:[#allocation4 + $0x1b0] sm:$0xff]
    %v722 = vld [vmem:[#allocation4 + $0x1b8] sm:$0xff]
    %v723 = vld [vmem:[#allocation4 + $0x1c0] sm:$0xff]
    %v724 = vld [vmem:[#allocation4 + $0x1c8] sm:$0xff]
    %v725 = vld [vmem:[#allocation4 + $0x1d0] sm:$0xff]
    %v726 = vld [vmem:[#allocation4 + $0x1d8] sm:$0xff]
    %v727 = vld [vmem:[#allocation4 + $0x1e0] sm:$0xff]
    %v728 = vld [vmem:[#allocation4 + $0x1e8] sm:$0xff]
    %v729 = vld [vmem:[#allocation4 + $0x1f0] sm:$0xff]
    %v730 = vld [vmem:[#allocation4 + $0x1f8] sm:$0xff]
    %v731 = vld [vmem:[#allocation4 + $0x200] sm:$0xff]
    %v732 = vld [vmem:[#allocation4 + $0x208] sm:$0xff]
    %v733 = vld [vmem:[#allocation4 + $0x210] sm:$0xff]
    %v734 = vld [vmem:[#allocation4 + $0x218] sm:$0xff]
    %v735 = vld [vmem:[#allocation4 + $0x220] sm:$0xff]
    %v736 = vld [vmem:[#allocation4 + $0x228] sm:$0xff]
    %v737 = vld [vmem:[#allocation4 + $0x230] sm:$0xff]
    %v738 = vld [vmem:[#allocation4 + $0x238] sm:$0xff]
    %v739 = vld [vmem:[#allocation4 + $0x240] sm:$0xff]
    %v740 = vld [vmem:[#allocation4 + $0x248] sm:$0xff]
    %v741 = vld [vmem:[#allocation4 + $0x250] sm:$0xff]
    %v742 = vld [vmem:[#allocation4 + $0x258] sm:$0xff]
    %v743 = vld [vmem:[#allocation4 + $0x260] sm:$0xff]
    %v744 = vld [vmem:[#allocation4 + $0x268] sm:$0xff]
    %v745 = vld [vmem:[#allocation4 + $0x270] sm:$0xff]
    %v746 = vld [vmem:[#allocation4 + $0x278] sm:$0xff]
    %v747 = vld [vmem:[#allocation4 + $0x280] sm:$0xff]
    %v748 = vld [vmem:[#allocation4 + $0x288] sm:$0xff]
    %v749 = vld [vmem:[#allocation4 + $0x290] sm:$0xff]
    %v750 = vld [vmem:[#allocation4 + $0x298] sm:$0xff]
    %v751 = vld [vmem:[#allocation4 + $0x2a0] sm:$0xff]
    %v752 = vld [vmem:[#allocation4 + $0x2a8] sm:$0xff]
    %v753 = vld [vmem:[#allocation4 + $0x2b0] sm:$0xff]
    %v754 = vld [vmem:[#allocation4 + $0x2b8] sm:$0xff]
    %v755 = vld [vmem:[#allocation4 + $0x2c0] sm:$0xff]
    %v756 = vld [vmem:[#allocation4 + $0x2c8] sm:$0xff]
    %v757 = vld [vmem:[#allocation4 + $0x2d0] sm:$0xff]
    %v758 = vld [vmem:[#allocation4 + $0x2d8] sm:$0xff]
    %v759 = vld [vmem:[#allocation4 + $0x2e0] sm:$0xff]
    %v760 = vld [vmem:[#allocation4 + $0x2e8] sm:$0xff]
    %v761 = vld [vmem:[#allocation4 + $0x2f0] sm:$0xff]
    %v762 = vld [vmem:[#allocation4 + $0x2f8] sm:$0xff]
    %v763 = vld [vmem:[#allocation4 + $0x300] sm:$0xff]
    %v764 = vld [vmem:[#allocation4 + $0x308] sm:$0xff]
    %v765 = vld [vmem:[#allocation4 + $0x310] sm:$0xff]
    %v766 = vld [vmem:[#allocation4 + $0x318] sm:$0xff]
    %v767 = vld [vmem:[#allocation4 + $0x320] sm:$0xff]
    %v768 = vld [vmem:[#allocation4 + $0x328] sm:$0xff]
    %v769 = vld [vmem:[#allocation4 + $0x330] sm:$0xff]
    %v770 = vld [vmem:[#allocation4 + $0x338] sm:$0xff]
    %v771 = vld [vmem:[#allocation4 + $0x340] sm:$0xff]
    %v772 = vld [vmem:[#allocation4 + $0x348] sm:$0xff]
    %v773 = vld [vmem:[#allocation4 + $0x350] sm:$0xff]
    %v774 = vld [vmem:[#allocation4 + $0x358] sm:$0xff]
    %v775 = vld [vmem:[#allocation4 + $0x360] sm:$0xff]
    %v776 = vld [vmem:[#allocation4 + $0x368] sm:$0xff]
    %v777 = vld [vmem:[#allocation4 + $0x370] sm:$0xff]
    %v778 = vld [vmem:[#allocation4 + $0x378] sm:$0xff]
    %v779 = vld [vmem:[#allocation4 + $0x380] sm:$0xff]
    %v780 = vld [vmem:[#allocation4 + $0x388] sm:$0xff]
    %v781 = vld [vmem:[#allocation4 + $0x390] sm:$0xff]
    %v782 = vld [vmem:[#allocation4 + $0x398] sm:$0xff]
    %v783 = vld [vmem:[#allocation4 + $0x3a0] sm:$0xff]
    %v784 = vld [vmem:[#allocation4 + $0x3a8] sm:$0xff]
    %v785 = vld [vmem:[#allocation4 + $0x3b0] sm:$0xff]
    %v786 = vld [vmem:[#allocation4 + $0x3b8] sm:$0xff]
    %v787 = vld [vmem:[#allocation4 + $0x3c0] sm:$0xff]
    %v788 = vld [vmem:[#allocation4 + $0x3c8] sm:$0xff]
    %v789 = vld [vmem:[#allocation4 + $0x3d0] sm:$0xff]
    %v790 = vld [vmem:[#allocation4 + $0x3d8] sm:$0xff]
    %v791 = vld [vmem:[#allocation4 + $0x3e0] sm:$0xff]
    %v792 = vld [vmem:[#allocation4 + $0x3e8] sm:$0xff]
    %v793 = vld [vmem:[#allocation4 + $0x3f0] sm:$0xff]
    %v794 = vld [vmem:[#allocation4 + $0x3f8] sm:$0xff]
    %v795 = vld [vmem:[#allocation4 + $0x400] sm:$0xff]
    %v796 = vld [vmem:[#allocation4 + $0x408] sm:$0xff]
    %v797 = vld [vmem:[#allocation4 + $0x410] sm:$0xff]
    %v798 = vld [vmem:[#allocation4 + $0x418] sm:$0xff]
    %v799 = vld [vmem:[#allocation4 + $0x420] sm:$0xff]
    %v800 = vld [vmem:[#allocation4 + $0x428] sm:$0xff]
    %v801 = vld [vmem:[#allocation4 + $0x430] sm:$0xff]
    %v802 = vld [vmem:[#allocation4 + $0x438] sm:$0xff]
    %v803 = vld [vmem:[#allocation4 + $0x440] sm:$0xff]
    %v804 = vld [vmem:[#allocation4 + $0x448] sm:$0xff]
    %v805 = vld [vmem:[#allocation4 + $0x450] sm:$0xff]
    %v806 = vld [vmem:[#allocation4 + $0x458] sm:$0xff]
    %v807 = vld [vmem:[#allocation4 + $0x460] sm:$0xff]
    %v808 = vld [vmem:[#allocation4 + $0x468] sm:$0xff]
    %v809 = vld [vmem:[#allocation4 + $0x470] sm:$0xff]
    %v810 = vld [vmem:[#allocation4 + $0x478] sm:$0xff]
    %v811 = vld [vmem:[#allocation4 + $0x480] sm:$0xff]
    %v812 = vld [vmem:[#allocation4 + $0x488] sm:$0xff]
    %v813 = vld [vmem:[#allocation4 + $0x490] sm:$0xff]
    %v814 = vld [vmem:[#allocation4 + $0x498] sm:$0xff]
    %v815 = vld [vmem:[#allocation4 + $0x4a0] sm:$0xff]
    %v816 = vld [vmem:[#allocation4 + $0x4a8] sm:$0xff]
    %v817 = vld [vmem:[#allocation4 + $0x4b0] sm:$0xff]
    %v818 = vld [vmem:[#allocation4 + $0x4b8] sm:$0xff]
    %v819 = vld [vmem:[#allocation4 + $0x4c0] sm:$0xff]
    %v820 = vld [vmem:[#allocation4 + $0x4c8] sm:$0xff]
    %v821 = vld [vmem:[#allocation4 + $0x4d0] sm:$0xff]
    %v822 = vld [vmem:[#allocation4 + $0x4d8] sm:$0xff]
    %v823 = vld [vmem:[#allocation4 + $0x4e0] sm:$0xff]
    %v824 = vld [vmem:[#allocation4 + $0x4e8] sm:$0xff]
    %v825 = vld [vmem:[#allocation4 + $0x4f0] sm:$0xff]
    %v826 = vld [vmem:[#allocation4 + $0x4f8] sm:$0xff]
    %v827 = vld [vmem:[#allocation4 + $0x500] sm:$0xff]
    %v828 = vld [vmem:[#allocation4 + $0x508] sm:$0xff]
    %v829 = vld [vmem:[#allocation4 + $0x510] sm:$0xff]
    %v830 = vld [vmem:[#allocation4 + $0x518] sm:$0xff]
    %v831 = vld [vmem:[#allocation4 + $0x520] sm:$0xff]
    %v832 = vld [vmem:[#allocation4 + $0x528] sm:$0xff]
    %v833 = vld [vmem:[#allocation4 + $0x530] sm:$0xff]
    %v834 = vld [vmem:[#allocation4 + $0x538] sm:$0xff]
    %v835 = vld [vmem:[#allocation4 + $0x540] sm:$0xff]
    %v836 = vld [vmem:[#allocation4 + $0x548] sm:$0xff]
    %v837 = vld [vmem:[#allocation4 + $0x550] sm:$0xff]
    %v838 = vld [vmem:[#allocation4 + $0x558] sm:$0xff]
    %v839 = vld [vmem:[#allocation4 + $0x560] sm:$0xff]
    %v840 = vld [vmem:[#allocation4 + $0x568] sm:$0xff]
    %v841 = vld [vmem:[#allocation4 + $0x570] sm:$0xff]
    %v842 = vld [vmem:[#allocation4 + $0x578] sm:$0xff]
    %v843 = vld [vmem:[#allocation4 + $0x580] sm:$0xff]
    %v844 = vld [vmem:[#allocation4 + $0x588] sm:$0xff]
    %v845 = vld [vmem:[#allocation4 + $0x590] sm:$0xff]
    %v846 = vld [vmem:[#allocation4 + $0x598] sm:$0xff]
    %v847 = vld [vmem:[#allocation4 + $0x5a0] sm:$0xff]
    %v848 = vld [vmem:[#allocation4 + $0x5a8] sm:$0xff]
    %v849 = vld [vmem:[#allocation4 + $0x5b0] sm:$0xff]
    %v850 = vld [vmem:[#allocation4 + $0x5b8] sm:$0xff]
    %v851 = vld [vmem:[#allocation4 + $0x5c0] sm:$0xff]
    %v852 = vld [vmem:[#allocation4 + $0x5c8] sm:$0xff]
    %v853 = vld [vmem:[#allocation4 + $0x5d0] sm:$0xff]
    %v854 = vld [vmem:[#allocation4 + $0x5d8] sm:$0xff]
    %v855 = vld [vmem:[#allocation4 + $0x5e0] sm:$0xff]
    %v856 = vld [vmem:[#allocation4 + $0x5e8] sm:$0xff]
    %v857 = vld [vmem:[#allocation4 + $0x5f0] sm:$0xff]
    %v858 = vld [vmem:[#allocation4 + $0x5f8] sm:$0xff]
    %v859 = vld [vmem:[#allocation4 + $0x600] sm:$0xff]
    %v860 = vld [vmem:[#allocation4 + $0x608] sm:$0xff]
    %v861 = vld [vmem:[#allocation4 + $0x610] sm:$0xff]
    %v862 = vld [vmem:[#allocation4 + $0x618] sm:$0xff]
    %v863 = vld [vmem:[#allocation4 + $0x620] sm:$0xff]
    %v864 = vld [vmem:[#allocation4 + $0x628] sm:$0xff]
    %v865 = vld [vmem:[#allocation4 + $0x630] sm:$0xff]
    %v866 = vld [vmem:[#allocation4 + $0x638] sm:$0xff]
    %v867 = vld [vmem:[#allocation4 + $0x640] sm:$0xff]
    %v868 = vld [vmem:[#allocation4 + $0x648] sm:$0xff]
    %v869 = vld [vmem:[#allocation4 + $0x650] sm:$0xff]
    %v870 = vld [vmem:[#allocation4 + $0x658] sm:$0xff]
    %v871 = vld [vmem:[#allocation4 + $0x660] sm:$0xff]
    %v872 = vld [vmem:[#allocation4 + $0x668] sm:$0xff]
    %v873 = vld [vmem:[#allocation4 + $0x670] sm:$0xff]
    %v874 = vld [vmem:[#allocation4 + $0x678] sm:$0xff]
    %v875 = vld [vmem:[#allocation4 + $0x680] sm:$0xff]
    %v876 = vld [vmem:[#allocation4 + $0x688] sm:$0xff]
    %v877 = vld [vmem:[#allocation4 + $0x690] sm:$0xff]
    %v878 = vld [vmem:[#allocation4 + $0x698] sm:$0xff]
    %v879 = vld [vmem:[#allocation4 + $0x6a0] sm:$0xff]
    %v880 = vld [vmem:[#allocation4 + $0x6a8] sm:$0xff]
    %v881 = vld [vmem:[#allocation4 + $0x6b0] sm:$0xff]
    %v882 = vld [vmem:[#allocation4 + $0x6b8] sm:$0xff]
    %v883 = vld [vmem:[#allocation4 + $0x6c0] sm:$0xff]
    %v884 = vld [vmem:[#allocation4 + $0x6c8] sm:$0xff]
    %v885 = vld [vmem:[#allocation4 + $0x6d0] sm:$0xff]
    %v886 = vld [vmem:[#allocation4 + $0x6d8] sm:$0xff]
    %v887 = vld [vmem:[#allocation4 + $0x6e0] sm:$0xff]
    %v888 = vld [vmem:[#allocation4 + $0x6e8] sm:$0xff]
    %v889 = vld [vmem:[#allocation4 + $0x6f0] sm:$0xff]
    %v890 = vld [vmem:[#allocation4 + $0x6f8] sm:$0xff]
    %v891 = vld [vmem:[#allocation4 + $0x700] sm:$0xff]
    %v892 = vld [vmem:[#allocation4 + $0x708] sm:$0xff]
    %v893 = vld [vmem:[#allocation4 + $0x710] sm:$0xff]
    %v894 = vld [vmem:[#allocation4 + $0x718] sm:$0xff]
    %v895 = vld [vmem:[#allocation4 + $0x720] sm:$0xff]
    %v896 = vld [vmem:[#allocation4 + $0x728] sm:$0xff]
    %v897 = vld [vmem:[#allocation4 + $0x730] sm:$0xff]
    %v898 = vld [vmem:[#allocation4 + $0x738] sm:$0xff]
    %v899 = vld [vmem:[#allocation4 + $0x740] sm:$0xff]
    %v900 = vld [vmem:[#allocation4 + $0x748] sm:$0xff]
    %v901 = vld [vmem:[#allocation4 + $0x750] sm:$0xff]
    %v902 = vld [vmem:[#allocation4 + $0x758] sm:$0xff]
    %v903 = vld [vmem:[#allocation4 + $0x760] sm:$0xff]
    %v904 = vld [vmem:[#allocation4 + $0x768] sm:$0xff]
    %v905 = vld [vmem:[#allocation4 + $0x770] sm:$0xff]
    %v906 = vld [vmem:[#allocation4 + $0x778] sm:$0xff]
    %v907 = vld [vmem:[#allocation4 + $0x780] sm:$0xff]
    %v908 = vld [vmem:[#allocation4 + $0x788] sm:$0xff]
    %v909 = vld [vmem:[#allocation4 + $0x790] sm:$0xff]
    %v910 = vld [vmem:[#allocation4 + $0x798] sm:$0xff]
    %v911 = vld [vmem:[#allocation4 + $0x7a0] sm:$0xff]
    %v912 = vld [vmem:[#allocation4 + $0x7a8] sm:$0xff]
    %v913 = vld [vmem:[#allocation4 + $0x7b0] sm:$0xff]
    %v914 = vld [vmem:[#allocation4 + $0x7b8] sm:$0xff]
    %v915 = vld [vmem:[#allocation4 + $0x7c0] sm:$0xff]
    %v916 = vld [vmem:[#allocation4 + $0x7c8] sm:$0xff]
    %v917 = vld [vmem:[#allocation4 + $0x7d0] sm:$0xff]
    %v918 = vld [vmem:[#allocation4 + $0x7d8] sm:$0xff]
    %v919 = vld [vmem:[#allocation4 + $0x7e0] sm:$0xff]
    %v920 = vld [vmem:[#allocation4 + $0x7e8] sm:$0xff]
    %v921 = vld [vmem:[#allocation4 + $0x7f0] sm:$0xff]
    %v922 = vld [vmem:[#allocation4 + $0x7f8] sm:$0xff]
    %v923 = vld [vmem:[%s4] sm:$0xf]
    %v925 = vperm.slane %v923, 0
    %v926 = vperm.slane %v923, 1
    %v927 = vperm.slane %v923, 2
    %v928 = vperm.slane %v923, 3
    %933 = vmatpush.msra.mxu0 %v727
    %934 = vmatpush.msra.mxu0 %v723
    %935 = vmatpush.msra.mxu0 %v719
    %936 = vmatpush.msra.mxu0 %v715
    %937 = vmatpush.msra.mxu0 %v711
    %938 = vmatpush.msra.mxu0 %v707
    %939 = vmatpush.msra.mxu0 %v703
    %940 = vmatpush.msra.mxu0 %v699
    %941 = vmatpush.msra.mxu0 %v695
    %942 = vmatpush.msra.mxu0 %v691
    %943 = vmatpush.msra.mxu0 %v687
    %944 = vmatpush.msra.mxu0 %v683
    %945 = vmatpush.msra.mxu0 %v679
    %946 = vmatpush.msra.mxu0 %v675
    %947 = vmatpush.msra.mxu0 %v671
    %948 = vmatpush.msra.mxu0 %v667
    %949 = vmatmul.f32.gmra.mxu0 %v663
    %v950 = vpop.f32.mrf.mxu0
    %v951 = vadd.f32 %v925, %v950
    %952 = vdwg.mxu0
    %953 = vmatpush.msra.mxu0 %v791
    %954 = vmatpush.msra.mxu0 %v787
    %955 = vmatpush.msra.mxu0 %v783
    %956 = vmatpush.msra.mxu0 %v779
    %957 = vmatpush.msra.mxu0 %v775
    %958 = vmatpush.msra.mxu0 %v771
    %959 = vmatpush.msra.mxu0 %v767
    %960 = vmatpush.msra.mxu0 %v763
    %961 = vmatpush.msra.mxu0 %v759
    %962 = vmatpush.msra.mxu0 %v755
    %963 = vmatpush.msra.mxu0 %v751
    %964 = vmatpush.msra.mxu0 %v747
    %965 = vmatpush.msra.mxu0 %v743
    %966 = vmatpush.msra.mxu0 %v739
    %967 = vmatpush.msra.mxu0 %v735
    %968 = vmatpush.msra.mxu0 %v731
    %969 = vmatmul.f32.gmra.mxu0 %v664
    %v970 = vpop.f32.mrf.mxu0
    %v971 = vadd.f32 %v951, %v970
    %972 = vdwg.mxu0
    %973 = vmatpush.msra.mxu0 %v855
    %974 = vmatpush.msra.mxu0 %v851
    %975 = vmatpush.msra.mxu0 %v847
    %976 = vmatpush.msra.mxu0 %v843
    %977 = vmatpush.msra.mxu0 %v839
    %978 = vmatpush.msra.mxu0 %v835
    %979 = vmatpush.msra.mxu0 %v831
    %980 = vmatpush.msra.mxu0 %v827
    %981 = vmatpush.msra.mxu0 %v823
    %982 = vmatpush.msra.mxu0 %v819
    %983 = vmatpush.msra.mxu0 %v815
    %984 = vmatpush.msra.mxu0 %v811
    %985 = vmatpush.msra.mxu0 %v807
    %986 = vmatpush.msra.mxu0 %v803
    %987 = vmatpush.msra.mxu0 %v799
    %988 = vmatpush.msra.mxu0 %v795
    %989 = vmatmul.f32.gmra.mxu0 %v665
    %v990 = vpop.f32.mrf.mxu0
    %v991 = vadd.f32 %v971, %v990
    %992 = vdwg.mxu0
    %993 = vmatpush.msra.mxu0 %v919
    %994 = vmatpush.msra.mxu0 %v915
    %995 = vmatpush.msra.mxu0 %v911
    %996 = vmatpush.msra.mxu0 %v907
    %997 = vmatpush.msra.mxu0 %v903
    %998 = vmatpush.msra.mxu0 %v899
    %999 = vmatpush.msra.mxu0 %v895
    %1000 = vmatpush.msra.mxu0 %v891
    %1001 = vmatpush.msra.mxu0 %v887
    %1002 = vmatpush.msra.mxu0 %v883
    %1003 = vmatpush.msra.mxu0 %v879
    %1004 = vmatpush.msra.mxu0 %v875
    %1005 = vmatpush.msra.mxu0 %v871
    %1006 = vmatpush.msra.mxu0 %v867
    %1007 = vmatpush.msra.mxu0 %v863
    %1008 = vmatpush.msra.mxu0 %v859
    %1009 = vmatmul.f32.gmra.mxu0 %v666
    %v1010 = vpop.f32.mrf.mxu0
    %v1011 = vadd.f32 %v991, %v1010
    %1012 = vdwg.mxu0
    %1013 = vmatpush.msra.mxu0 %v728
    %1014 = vmatpush.msra.mxu0 %v724
    %1015 = vmatpush.msra.mxu0 %v720
    %1016 = vmatpush.msra.mxu0 %v716
    %1017 = vmatpush.msra.mxu0 %v712
    %1018 = vmatpush.msra.mxu0 %v708
    %1019 = vmatpush.msra.mxu0 %v704
    %1020 = vmatpush.msra.mxu0 %v700
    %1021 = vmatpush.msra.mxu0 %v696
    %1022 = vmatpush.msra.mxu0 %v692
    %1023 = vmatpush.msra.mxu0 %v688
    %1024 = vmatpush.msra.mxu0 %v684
    %1025 = vmatpush.msra.mxu0 %v680
    %1026 = vmatpush.msra.mxu0 %v676
    %1027 = vmatpush.msra.mxu0 %v672
    %1028 = vmatpush.msra.mxu0 %v668
    %1029 = vmatmul.f32.gmra.mxu0 %v663
    %v1030 = vpop.f32.mrf.mxu0
    %v1031 = vadd.f32 %v926, %v1030
    %1032 = vdwg.mxu0
    %1033 = vmatpush.msra.mxu0 %v792
    %1034 = vmatpush.msra.mxu0 %v788
    %1035 = vmatpush.msra.mxu0 %v784
    %1036 = vmatpush.msra.mxu0 %v780
    %1037 = vmatpush.msra.mxu0 %v776
    %1038 = vmatpush.msra.mxu0 %v772
    %1039 = vmatpush.msra.mxu0 %v768
    %1040 = vmatpush.msra.mxu0 %v764
    %1041 = vmatpush.msra.mxu0 %v760
    %1042 = vmatpush.msra.mxu0 %v756
    %1043 = vmatpush.msra.mxu0 %v752
    %1044 = vmatpush.msra.mxu0 %v748
    %1045 = vmatpush.msra.mxu0 %v744
    %1046 = vmatpush.msra.mxu0 %v740
    %1047 = vmatpush.msra.mxu0 %v736
    %1048 = vmatpush.msra.mxu0 %v732
    %1049 = vmatmul.f32.gmra.mxu0 %v664
    %v1050 = vpop.f32.mrf.mxu0
    %v1051 = vadd.f32 %v1031, %v1050
    %1052 = vdwg.mxu0
    %1053 = vmatpush.msra.mxu0 %v856
    %1054 = vmatpush.msra.mxu0 %v852
    %1055 = vmatpush.msra.mxu0 %v848
    %1056 = vmatpush.msra.mxu0 %v844
    %1057 = vmatpush.msra.mxu0 %v840
    %1058 = vmatpush.msra.mxu0 %v836
    %1059 = vmatpush.msra.mxu0 %v832
    %1060 = vmatpush.msra.mxu0 %v828
    %1061 = vmatpush.msra.mxu0 %v824
    %1062 = vmatpush.msra.mxu0 %v820
    %1063 = vmatpush.msra.mxu0 %v816
    %1064 = vmatpush.msra.mxu0 %v812
    %1065 = vmatpush.msra.mxu0 %v808
    %1066 = vmatpush.msra.mxu0 %v804
    %1067 = vmatpush.msra.mxu0 %v800
    %1068 = vmatpush.msra.mxu0 %v796
    %1069 = vmatmul.f32.gmra.mxu0 %v665
    %v1070 = vpop.f32.mrf.mxu0
    %v1071 = vadd.f32 %v1051, %v1070
    %1072 = vdwg.mxu0
    %1073 = vmatpush.msra.mxu0 %v920
    %1074 = vmatpush.msra.mxu0 %v916
    %1075 = vmatpush.msra.mxu0 %v912
    %1076 = vmatpush.msra.mxu0 %v908
    %1077 = vmatpush.msra.mxu0 %v904
    %1078 = vmatpush.msra.mxu0 %v900
    %1079 = vmatpush.msra.mxu0 %v896
    %1080 = vmatpush.msra.mxu0 %v892
    %1081 = vmatpush.msra.mxu0 %v888
    %1082 = vmatpush.msra.mxu0 %v884
    %1083 = vmatpush.msra.mxu0 %v880
    %1084 = vmatpush.msra.mxu0 %v876
    %1085 = vmatpush.msra.mxu0 %v872
    %1086 = vmatpush.msra.mxu0 %v868
    %1087 = vmatpush.msra.mxu0 %v864
    %1088 = vmatpush.msra.mxu0 %v860
    %1089 = vmatmul.f32.gmra.mxu0 %v666
    %v1090 = vpop.f32.mrf.mxu0
    %v1091 = vadd.f32 %v1071, %v1090
    %1092 = vdwg.mxu0
    %1093 = vmatpush.msra.mxu0 %v729
    %1094 = vmatpush.msra.mxu0 %v725
    %1095 = vmatpush.msra.mxu0 %v721
    %1096 = vmatpush.msra.mxu0 %v717
    %1097 = vmatpush.msra.mxu0 %v713
    %1098 = vmatpush.msra.mxu0 %v709
    %1099 = vmatpush.msra.mxu0 %v705
    %1100 = vmatpush.msra.mxu0 %v701
    %1101 = vmatpush.msra.mxu0 %v697
    %1102 = vmatpush.msra.mxu0 %v693
    %1103 = vmatpush.msra.mxu0 %v689
    %1104 = vmatpush.msra.mxu0 %v685
    %1105 = vmatpush.msra.mxu0 %v681
    %1106 = vmatpush.msra.mxu0 %v677
    %1107 = vmatpush.msra.mxu0 %v673
    %1108 = vmatpush.msra.mxu0 %v669
    %1109 = vmatmul.f32.gmra.mxu0 %v663
    %v1110 = vpop.f32.mrf.mxu0
    %v1111 = vadd.f32 %v927, %v1110
    %1112 = vdwg.mxu0
    %1113 = vmatpush.msra.mxu0 %v793
    %1114 = vmatpush.msra.mxu0 %v789
    %1115 = vmatpush.msra.mxu0 %v785
    %1116 = vmatpush.msra.mxu0 %v781
    %1117 = vmatpush.msra.mxu0 %v777
    %1118 = vmatpush.msra.mxu0 %v773
    %1119 = vmatpush.msra.mxu0 %v769
    %1120 = vmatpush.msra.mxu0 %v765
    %1121 = vmatpush.msra.mxu0 %v761
    %1122 = vmatpush.msra.mxu0 %v757
    %1123 = vmatpush.msra.mxu0 %v753
    %1124 = vmatpush.msra.mxu0 %v749
    %1125 = vmatpush.msra.mxu0 %v745
    %1126 = vmatpush.msra.mxu0 %v741
    %1127 = vmatpush.msra.mxu0 %v737
    %1128 = vmatpush.msra.mxu0 %v733
    %1129 = vmatmul.f32.gmra.mxu0 %v664
    %v1130 = vpop.f32.mrf.mxu0
    %v1131 = vadd.f32 %v1111, %v1130
    %1132 = vdwg.mxu0
    %1133 = vmatpush.msra.mxu0 %v857
    %1134 = vmatpush.msra.mxu0 %v853
    %1135 = vmatpush.msra.mxu0 %v849
    %1136 = vmatpush.msra.mxu0 %v845
    %1137 = vmatpush.msra.mxu0 %v841
    %1138 = vmatpush.msra.mxu0 %v837
    %1139 = vmatpush.msra.mxu0 %v833
    %1140 = vmatpush.msra.mxu0 %v829
    %1141 = vmatpush.msra.mxu0 %v825
    %1142 = vmatpush.msra.mxu0 %v821
    %1143 = vmatpush.msra.mxu0 %v817
    %1144 = vmatpush.msra.mxu0 %v813
    %1145 = vmatpush.msra.mxu0 %v809
    %1146 = vmatpush.msra.mxu0 %v805
    %1147 = vmatpush.msra.mxu0 %v801
    %1148 = vmatpush.msra.mxu0 %v797
    %1149 = vmatmul.f32.gmra.mxu0 %v665
    %v1150 = vpop.f32.mrf.mxu0
    %v1151 = vadd.f32 %v1131, %v1150
    %1152 = vdwg.mxu0
    %1153 = vmatpush.msra.mxu0 %v921
    %1154 = vmatpush.msra.mxu0 %v917
    %1155 = vmatpush.msra.mxu0 %v913
    %1156 = vmatpush.msra.mxu0 %v909
    %1157 = vmatpush.msra.mxu0 %v905
    %1158 = vmatpush.msra.mxu0 %v901
    %1159 = vmatpush.msra.mxu0 %v897
    %1160 = vmatpush.msra.mxu0 %v893
    %1161 = vmatpush.msra.mxu0 %v889
    %1162 = vmatpush.msra.mxu0 %v885
    %1163 = vmatpush.msra.mxu0 %v881
    %1164 = vmatpush.msra.mxu0 %v877
    %1165 = vmatpush.msra.mxu0 %v873
    %1166 = vmatpush.msra.mxu0 %v869
    %1167 = vmatpush.msra.mxu0 %v865
    %1168 = vmatpush.msra.mxu0 %v861
    %1169 = vmatmul.f32.gmra.mxu0 %v666
    %v1170 = vpop.f32.mrf.mxu0
    %v1171 = vadd.f32 %v1151, %v1170
    %1172 = vdwg.mxu0
    %1173 = vmatpush.msra.mxu0 %v730
    %1174 = vmatpush.msra.mxu0 %v726
    %1175 = vmatpush.msra.mxu0 %v722
    %1176 = vmatpush.msra.mxu0 %v718
    %1177 = vmatpush.msra.mxu0 %v714
    %1178 = vmatpush.msra.mxu0 %v710
    %1179 = vmatpush.msra.mxu0 %v706
    %1180 = vmatpush.msra.mxu0 %v702
    %1181 = vmatpush.msra.mxu0 %v698
    %1182 = vmatpush.msra.mxu0 %v694
    %1183 = vmatpush.msra.mxu0 %v690
    %1184 = vmatpush.msra.mxu0 %v686
    %1185 = vmatpush.msra.mxu0 %v682
    %1186 = vmatpush.msra.mxu0 %v678
    %1187 = vmatpush.msra.mxu0 %v674
    %1188 = vmatpush.msra.mxu0 %v670
    %1189 = vmatmul.f32.gmra.mxu0 %v663
    %v1190 = vpop.f32.mrf.mxu0
    %v1191 = vadd.f32 %v928, %v1190
    %1192 = vdwg.mxu0
    %1193 = vmatpush.msra.mxu0 %v794
    %1194 = vmatpush.msra.mxu0 %v790
    %1195 = vmatpush.msra.mxu0 %v786
    %1196 = vmatpush.msra.mxu0 %v782
    %1197 = vmatpush.msra.mxu0 %v778
    %1198 = vmatpush.msra.mxu0 %v774
    %1199 = vmatpush.msra.mxu0 %v770
    %1200 = vmatpush.msra.mxu0 %v766
    %1201 = vmatpush.msra.mxu0 %v762
    %1202 = vmatpush.msra.mxu0 %v758
    %1203 = vmatpush.msra.mxu0 %v754
    %1204 = vmatpush.msra.mxu0 %v750
    %1205 = vmatpush.msra.mxu0 %v746
    %1206 = vmatpush.msra.mxu0 %v742
    %1207 = vmatpush.msra.mxu0 %v738
    %1208 = vmatpush.msra.mxu0 %v734
    %1209 = vmatmul.f32.gmra.mxu0 %v664
    %v1210 = vpop.f32.mrf.mxu0
    %v1211 = vadd.f32 %v1191, %v1210
    %1212 = vdwg.mxu0
    %1213 = vmatpush.msra.mxu0 %v858
    %1214 = vmatpush.msra.mxu0 %v854
    %1215 = vmatpush.msra.mxu0 %v850
    %1216 = vmatpush.msra.mxu0 %v846
    %1217 = vmatpush.msra.mxu0 %v842
    %1218 = vmatpush.msra.mxu0 %v838
    %1219 = vmatpush.msra.mxu0 %v834
    %1220 = vmatpush.msra.mxu0 %v830
    %1221 = vmatpush.msra.mxu0 %v826
    %1222 = vmatpush.msra.mxu0 %v822
    %1223 = vmatpush.msra.mxu0 %v818
    %1224 = vmatpush.msra.mxu0 %v814
    %1225 = vmatpush.msra.mxu0 %v810
    %1226 = vmatpush.msra.mxu0 %v806
    %1227 = vmatpush.msra.mxu0 %v802
    %1228 = vmatpush.msra.mxu0 %v798
    %1229 = vmatmul.f32.gmra.mxu0 %v665
    %v1230 = vpop.f32.mrf.mxu0
    %v1231 = vadd.f32 %v1211, %v1230
    %1232 = vdwg.mxu0
    %1233 = vmatpush.msra.mxu0 %v922
    %1234 = vmatpush.msra.mxu0 %v918
    %1235 = vmatpush.msra.mxu0 %v914
    %1236 = vmatpush.msra.mxu0 %v910
    %1237 = vmatpush.msra.mxu0 %v906
    %1238 = vmatpush.msra.mxu0 %v902
    %1239 = vmatpush.msra.mxu0 %v898
    %1240 = vmatpush.msra.mxu0 %v894
    %1241 = vmatpush.msra.mxu0 %v890
    %1242 = vmatpush.msra.mxu0 %v886
    %1243 = vmatpush.msra.mxu0 %v882
    %1244 = vmatpush.msra.mxu0 %v878
    %1245 = vmatpush.msra.mxu0 %v874
    %1246 = vmatpush.msra.mxu0 %v870
    %1247 = vmatpush.msra.mxu0 %v866
    %1248 = vmatpush.msra.mxu0 %v862
    %1249 = vmatmul.f32.gmra.mxu0 %v666
    %v1250 = vpop.f32.mrf.mxu0
    %v1251 = vadd.f32 %v1231, %v1250
    %1252 = vdwg.mxu0
    %v1253 = vmax.f32 %v1011, 0.0
    %v1254 = vmax.f32 %v1091, 0.0
    %v1255 = vmax.f32 %v1171, 0.0
    %v1256 = vmax.f32 %v1251, 0.0
    %v1257 = vld [vmem:[#allocation6] sm:$0xff]
    %v1258 = vld [vmem:[#allocation6 + $0x8] sm:$0xff]
    %v1259 = vld [vmem:[#allocation6 + $0x10] sm:$0xff]
    %v1260 = vld [vmem:[#allocation6 + $0x18] sm:$0xff]
    %v1261 = vld [vmem:[#allocation6 + $0x20] sm:$0xff]
    %v1262 = vld [vmem:[#allocation6 + $0x28] sm:$0xff]
    %v1263 = vld [vmem:[#allocation6 + $0x30] sm:$0xff]
    %v1264 = vld [vmem:[#allocation6 + $0x38] sm:$0xff]
    %v1265 = vld [vmem:[#allocation6 + $0x40] sm:$0xff]
    %v1266 = vld [vmem:[#allocation6 + $0x48] sm:$0xff]
    %v1267 = vld [vmem:[#allocation6 + $0x50] sm:$0xff]
    %v1268 = vld [vmem:[#allocation6 + $0x58] sm:$0xff]
    %v1269 = vld [vmem:[#allocation6 + $0x60] sm:$0xff]
    %v1270 = vld [vmem:[#allocation6 + $0x68] sm:$0xff]
    %v1271 = vld [vmem:[#allocation6 + $0x70] sm:$0xff]
    %v1272 = vld [vmem:[#allocation6 + $0x78] sm:$0xff]
    %v1273 = vld [vmem:[#allocation6 + $0x80] sm:$0xff]
    %v1274 = vld [vmem:[#allocation6 + $0x88] sm:$0xff]
    %v1275 = vld [vmem:[#allocation6 + $0x90] sm:$0xff]
    %v1276 = vld [vmem:[#allocation6 + $0x98] sm:$0xff]
    %v1277 = vld [vmem:[#allocation6 + $0xa0] sm:$0xff]
    %v1278 = vld [vmem:[#allocation6 + $0xa8] sm:$0xff]
    %v1279 = vld [vmem:[#allocation6 + $0xb0] sm:$0xff]
    %v1280 = vld [vmem:[#allocation6 + $0xb8] sm:$0xff]
    %v1281 = vld [vmem:[#allocation6 + $0xc0] sm:$0xff]
    %v1282 = vld [vmem:[#allocation6 + $0xc8] sm:$0xff]
    %v1283 = vld [vmem:[#allocation6 + $0xd0] sm:$0xff]
    %v1284 = vld [vmem:[#allocation6 + $0xd8] sm:$0xff]
    %v1285 = vld [vmem:[#allocation6 + $0xe0] sm:$0xff]
    %v1286 = vld [vmem:[#allocation6 + $0xe8] sm:$0xff]
    %v1287 = vld [vmem:[#allocation6 + $0xf0] sm:$0xff]
    %v1288 = vld [vmem:[#allocation6 + $0xf8] sm:$0xff]
    %v1289 = vld [vmem:[#allocation6 + $0x100] sm:$0xff]
    %v1290 = vld [vmem:[#allocation6 + $0x108] sm:$0xff]
    %v1291 = vld [vmem:[#allocation6 + $0x110] sm:$0xff]
    %v1292 = vld [vmem:[#allocation6 + $0x118] sm:$0xff]
    %v1293 = vld [vmem:[#allocation6 + $0x120] sm:$0xff]
    %v1294 = vld [vmem:[#allocation6 + $0x128] sm:$0xff]
    %v1295 = vld [vmem:[#allocation6 + $0x130] sm:$0xff]
    %v1296 = vld [vmem:[#allocation6 + $0x138] sm:$0xff]
    %v1297 = vld [vmem:[#allocation6 + $0x140] sm:$0xff]
    %v1298 = vld [vmem:[#allocation6 + $0x148] sm:$0xff]
    %v1299 = vld [vmem:[#allocation6 + $0x150] sm:$0xff]
    %v1300 = vld [vmem:[#allocation6 + $0x158] sm:$0xff]
    %v1301 = vld [vmem:[#allocation6 + $0x160] sm:$0xff]
    %v1302 = vld [vmem:[#allocation6 + $0x168] sm:$0xff]
    %v1303 = vld [vmem:[#allocation6 + $0x170] sm:$0xff]
    %v1304 = vld [vmem:[#allocation6 + $0x178] sm:$0xff]
    %v1305 = vld [vmem:[#allocation6 + $0x180] sm:$0xff]
    %v1306 = vld [vmem:[#allocation6 + $0x188] sm:$0xff]
    %v1307 = vld [vmem:[#allocation6 + $0x190] sm:$0xff]
    %v1308 = vld [vmem:[#allocation6 + $0x198] sm:$0xff]
    %v1309 = vld [vmem:[#allocation6 + $0x1a0] sm:$0xff]
    %v1310 = vld [vmem:[#allocation6 + $0x1a8] sm:$0xff]
    %v1311 = vld [vmem:[#allocation6 + $0x1b0] sm:$0xff]
    %v1312 = vld [vmem:[#allocation6 + $0x1b8] sm:$0xff]
    %v1313 = vld [vmem:[#allocation6 + $0x1c0] sm:$0xff]
    %v1314 = vld [vmem:[#allocation6 + $0x1c8] sm:$0xff]
    %v1315 = vld [vmem:[#allocation6 + $0x1d0] sm:$0xff]
    %v1316 = vld [vmem:[#allocation6 + $0x1d8] sm:$0xff]
    %v1317 = vld [vmem:[#allocation6 + $0x1e0] sm:$0xff]
    %v1318 = vld [vmem:[#allocation6 + $0x1e8] sm:$0xff]
    %v1319 = vld [vmem:[#allocation6 + $0x1f0] sm:$0xff]
    %v1320 = vld [vmem:[#allocation6 + $0x1f8] sm:$0xff]
    %v1321 = vld [vmem:[%s6] sm:$0x1]
    %v1323 = vperm.slane %v1321, 0
    %1325 = vmatpush.msra.mxu0 %v1272
    %1326 = vmatpush.msra.mxu0 %v1271
    %1327 = vmatpush.msra.mxu0 %v1270
    %1328 = vmatpush.msra.mxu0 %v1269
    %1329 = vmatpush.msra.mxu0 %v1268
    %1330 = vmatpush.msra.mxu0 %v1267
    %1331 = vmatpush.msra.mxu0 %v1266
    %1332 = vmatpush.msra.mxu0 %v1265
    %1333 = vmatpush.msra.mxu0 %v1264
    %1334 = vmatpush.msra.mxu0 %v1263
    %1335 = vmatpush.msra.mxu0 %v1262
    %1336 = vmatpush.msra.mxu0 %v1261
    %1337 = vmatpush.msra.mxu0 %v1260
    %1338 = vmatpush.msra.mxu0 %v1259
    %1339 = vmatpush.msra.mxu0 %v1258
    %1340 = vmatpush.msra.mxu0 %v1257
    %1341 = vmatmul.f32.gmra.mxu0 %v1253
    %v1342 = vpop.f32.mrf.mxu0
    %v1343 = vadd.f32 %v1323, %v1342
    %1344 = vdwg.mxu0
    %1345 = vmatpush.msra.mxu0 %v1288
    %1346 = vmatpush.msra.mxu0 %v1287
    %1347 = vmatpush.msra.mxu0 %v1286
    %1348 = vmatpush.msra.mxu0 %v1285
    %1349 = vmatpush.msra.mxu0 %v1284
    %1350 = vmatpush.msra.mxu0 %v1283
    %1351 = vmatpush.msra.mxu0 %v1282
    %1352 = vmatpush.msra.mxu0 %v1281
    %1353 = vmatpush.msra.mxu0 %v1280
    %1354 = vmatpush.msra.mxu0 %v1279
    %1355 = vmatpush.msra.mxu0 %v1278
    %1356 = vmatpush.msra.mxu0 %v1277
    %1357 = vmatpush.msra.mxu0 %v1276
    %1358 = vmatpush.msra.mxu0 %v1275
    %1359 = vmatpush.msra.mxu0 %v1274
    %1360 = vmatpush.msra.mxu0 %v1273
    %1361 = vmatmul.f32.gmra.mxu0 %v1254
    %v1362 = vpop.f32.mrf.mxu0
    %v1363 = vadd.f32 %v1343, %v1362
    %1364 = vdwg.mxu0
    %1365 = vmatpush.msra.mxu0 %v1304
    %1366 = vmatpush.msra.mxu0 %v1303
    %1367 = vmatpush.msra.mxu0 %v1302
    %1368 = vmatpush.msra.mxu0 %v1301
    %1369 = vmatpush.msra.mxu0 %v1300
    %1370 = vmatpush.msra.mxu0 %v1299
    %1371 = vmatpush.msra.mxu0 %v1298
    %1372 = vmatpush.msra.mxu0 %v1297
    %1373 = vmatpush.msra.mxu0 %v1296
    %1374 = vmatpush.msra.mxu0 %v1295
    %1375 = vmatpush.msra.mxu0 %v1294
    %1376 = vmatpush.msra.mxu0 %v1293
    %1377 = vmatpush.msra.mxu0 %v1292
    %1378 = vmatpush.msra.mxu0 %v1291
    %1379 = vmatpush.msra.mxu0 %v1290
    %1380 = vmatpush.msra.mxu0 %v1289
    %1381 = vmatmul.f32.gmra.mxu0 %v1255
    %v1382 = vpop.f32.mrf.mxu0
    %v1383 = vadd.f32 %v1363, %v1382
    %1384 = vdwg.mxu0
    %1385 = vmatpush.msra.mxu0 %v1320
    %1386 = vmatpush.msra.mxu0 %v1319
    %1387 = vmatpush.msra.mxu0 %v1318
    %1388 = vmatpush.msra.mxu0 %v1317
    %1389 = vmatpush.msra.mxu0 %v1316
    %1390 = vmatpush.msra.mxu0 %v1315
    %1391 = vmatpush.msra.mxu0 %v1314
    %1392 = vmatpush.msra.mxu0 %v1313
    %1393 = vmatpush.msra.mxu0 %v1312
    %1394 = vmatpush.msra.mxu0 %v1311
    %1395 = vmatpush.msra.mxu0 %v1310
    %1396 = vmatpush.msra.mxu0 %v1309
    %1397 = vmatpush.msra.mxu0 %v1308
    %1398 = vmatpush.msra.mxu0 %v1307
    %1399 = vmatpush.msra.mxu0 %v1306
    %1400 = vmatpush.msra.mxu0 %v1305
    %1401 = vmatmul.f32.gmra.mxu0 %v1256
    %v1402 = vpop.f32.mrf.mxu0
    %v1403 = vadd.f32 %v1383, %v1402
    %1404 = vdwg.mxu0
    %1405 = vst [vmem:[%s7] sm:$0xff] %v1403
    // Predicated region
    $region42: #{my_model_forward.1} parent=1 // pred_check
      _
    $region43: #{my_model_forward.1} parent=1 // pred_check_branch
      %1407 = sbr.rel (0) target = $region45
    $region44: #{my_model_forward.1} parent=1 // pred_region
      _
    $region45: #{my_model_forward.1} parent=1 // pred_fallthru
      _
    // Predicated region
    $region46: #{my_model_forward.1} parent=1 // pred_check
      _
    $region47: #{my_model_forward.1} parent=1 // pred_check_branch
      %1409 = sbr.rel (0) target = $region49
    $region48: #{my_model_forward.1} parent=1 // pred_region
      _
    $region49: #{my_model_forward.1} parent=1 // pred_fallthru
      _
    %1410 = vsyncpa [#allocation3], 1
    %1411 = vsyncpa [#allocation5], 1

</llo_original>
